<compile_context>
chip_gen: v5e
topology: v5e:2x2
jax: 0.10.0
libtpu: 0.0.40
codegen_flags: <defaults>
</compile_context>

<pallas_src>
import functools
import itertools

import jax
import jax.numpy as jnp
from jax.experimental import pallas as pl
from jax.experimental.pallas import tpu as pltpu


# ----------------------------------------------------------------------------
# Fused Pallas kernel:  out = maybe_relu( W @ X + bias [+ residual] )
#   W : (Cout, K)   bf16   (BN scale folded into rows, resident across the grid)
#   X : (K, Mtile)  bf16   (im2col patches, tap-major / channel-minor K)
#   out/residual : (Cout, Mtile) f32, spatial M on the lane axis (dense stores)
# ----------------------------------------------------------------------------
def _make_kernel(apply_relu: bool, has_residual: bool):
    if has_residual:
        def kernel(w_ref, b_ref, x_ref, r_ref, o_ref):
            acc = jnp.dot(w_ref[...], x_ref[...],
                          preferred_element_type=jnp.float32)
            y = acc + b_ref[...] + r_ref[...]
            if apply_relu:
                y = jnp.maximum(y, 0.0)
            o_ref[...] = y.astype(o_ref.dtype)
    else:
        def kernel(w_ref, b_ref, x_ref, o_ref):
            acc = jnp.dot(w_ref[...], x_ref[...],
                          preferred_element_type=jnp.float32)
            y = acc + b_ref[...]
            if apply_relu:
                y = jnp.maximum(y, 0.0)
            o_ref[...] = y.astype(o_ref.dtype)
    return kernel


def _pick_tile(M: int, target: int = 512) -> int:
    """Spatial (lane-axis) tile: prefer 512-1024 wide tiles that divide M
    (unmasked stores + several grid steps for v7x megacore); otherwise fall back
    to `target` and let Pallas mask the partial final block."""
    if M <= target:
        return M
    for cand in (1024, 512):
        if M % cand == 0 and M // cand >= 2:
            return cand
    for cand in (512, 256, 128):
        if M % cand == 0:
            return cand
    return target


def fused_matmul_bias(w, bias, x_km, residual=None, relu=True):
    """w: (Cout, K) bf16, bias: (Cout,) f32, x_km: (K, M) bf16,
    residual: (Cout, M) f32 or None.  Returns (Cout, M) f32."""
    Cout, K = w.shape
    K2, M = x_km.shape
    assert K == K2
    tm = _pick_tile(M)
    grid = (pl.cdiv(M, tm),)
    bias2 = bias.reshape(Cout, 1).astype(jnp.float32)

    args = [w, bias2, x_km]
    in_specs = [
        pl.BlockSpec((Cout, K), lambda i: (0, 0)),   # folded weight (resident)
        pl.BlockSpec((Cout, 1), lambda i: (0, 0)),   # folded BN bias
        pl.BlockSpec((K, tm), lambda i: (0, i)),     # patch tile (lanes = spatial)
    ]
    if residual is not None:
        args.append(residual)
        in_specs.append(pl.BlockSpec((Cout, tm), lambda i: (0, i)))

    return pl.pallas_call(
        _make_kernel(relu, residual is not None),
        out_shape=jax.ShapeDtypeStruct((Cout, M), jnp.float32),
        grid=grid,
        in_specs=in_specs,
        out_specs=pl.BlockSpec((Cout, tm), lambda i: (0, i)),
        compiler_params=pltpu.CompilerParams(
            dimension_semantics=("parallel",)),
    )(*args)


# ----------------------------------------------------------------------------
# JAX glue: channel-major im2col (built straight in (K, M) bf16 layout)
# ----------------------------------------------------------------------------
def conv3d_bn(x_cn, p, stride, relu, residual_cn=None):
    """convbn_3d: Conv3d(k=3, pad=1, no bias) + BN [+ residual][ReLU].
    x_cn: (Cin, N, D, H, W) f32  ->  (Cout, N, Do, Ho, Wo) f32."""
    C, N, D, H, W = x_cn.shape
    Do = (D + 2 - 3) // stride + 1
    Ho = (H + 2 - 3) // stride + 1
    Wo = (W + 2 - 3) // stride + 1
    M = N * Do * Ho * Wo
    xp = jnp.pad(x_cn.astype(jnp.bfloat16),
                 ((0, 0), (0, 0), (1, 1), (1, 1), (1, 1)))
    slabs = []
    for kd in range(3):
        for kh in range(3):
            for kw in range(3):
                sl = xp[:, :,
                        kd:kd + (Do - 1) * stride + 1:stride,
                        kh:kh + (Ho - 1) * stride + 1:stride,
                        kw:kw + (Wo - 1) * stride + 1:stride]
                slabs.append(sl.reshape(C, M))
    patches = jnp.concatenate(slabs, axis=0)          # (27*C, M) bf16, tap-major
    res_flat = None
    if residual_cn is not None:
        res_flat = residual_cn.reshape(residual_cn.shape[0], M)
    y = fused_matmul_bias(p["w"], p["bias"], patches,
                          residual=res_flat, relu=relu)
    Cout = p["w"].shape[0]
    return y.reshape(Cout, N, Do, Ho, Wo)


# Per-dimension taps of the sub-pixel (phase) deconv decomposition:
#   even output parity -> [(input shift 0, kernel idx 1)]
#   odd  output parity -> [(shift 0, kernel idx 2), (shift 1, kernel idx 0)]
_DECONV_DIM_TAPS = (((0, 1),), ((0, 2), (1, 0)))


def deconv3d_bn(x_cn, p, relu, residual_cn=None):
    """ConvTranspose3d(k=3, s=2, pad=1, output_padding=1, no bias) + BN
    [+ residual][ReLU], via 8 sub-pixel phase convolutions.
    x_cn: (Cin, N, D, H, W) -> (Cout, N, 2D, 2H, 2W)."""
    C, N, D, H, W = x_cn.shape
    Cout = p["w_phase"][0].shape[0]
    M = N * D * H * W
    # one zero slice of padding on the high side for the odd-phase k=0 taps
    xp = jnp.pad(x_cn.astype(jnp.bfloat16),
                 ((0, 0), (0, 0), (0, 1), (0, 1), (0, 1)))
    phase_outs = []
    for pi, (pd, ph, pw) in enumerate(itertools.product((0, 1), repeat=3)):
        slabs = []
        for (sd, _kd) in _DECONV_DIM_TAPS[pd]:
            for (sh, _kh) in _DECONV_DIM_TAPS[ph]:
                for (sw, _kw) in _DECONV_DIM_TAPS[pw]:
                    sl = xp[:, :, sd:sd + D, sh:sh + H, sw:sw + W]
                    slabs.append(sl.reshape(C, M))
        patches = jnp.concatenate(slabs, axis=0)       # (ntaps*C, M) bf16
        res_flat = None
        if residual_cn is not None:
            res_flat = residual_cn[:, :, pd::2, ph::2, pw::2].reshape(Cout, M)
        y = fused_matmul_bias(p["w_phase"][pi], p["bias"], patches,
                              residual=res_flat, relu=relu)
        phase_outs.append(y.reshape(Cout, N, D, H, W))
    # interleave: out[c, n, 2d+pd, 2h+ph, 2w+pw] = phase[(pd,ph,pw)][c, n, d, h, w]
    ph8 = jnp.stack(phase_outs, axis=0).reshape(2, 2, 2, Cout, N, D, H, W)
    out = jnp.transpose(ph8, (3, 4, 5, 0, 6, 1, 7, 2))
    return out.reshape(Cout, N, 2 * D, 2 * H, 2 * W)


# ----------------------------------------------------------------------------
# Parameter construction (deterministic; eval-mode BN folded: scale -> weight
# rows, bias kept for the kernel epilogue)
# ----------------------------------------------------------------------------
def _bn_fold(key, cout, eps=1e-5):
    k1, k2, k3, k4 = jax.random.split(key, 4)
    gamma = 1.0 + 0.1 * jax.random.normal(k1, (cout,), jnp.float32)
    beta = 0.1 * jax.random.normal(k2, (cout,), jnp.float32)
    mean = 0.1 * jax.random.normal(k3, (cout,), jnp.float32)
    var = 1.0 + 0.1 * jnp.abs(jax.random.normal(k4, (cout,), jnp.float32))
    scale = gamma / jnp.sqrt(var + eps)
    bias = beta - mean * scale
    return scale, bias


def init_conv_layer(key, cin, cout):
    k_conv, k_bn = jax.random.split(key)
    # PyTorch Conv3d weight: (Cout, Cin, kD, kH, kW)
    w = 0.05 * jax.random.normal(k_conv, (cout, cin, 3, 3, 3), jnp.float32)
    scale, bias = _bn_fold(k_bn, cout)
    # A[o, (kd,kh,kw,c)] = w[o, c, kd, kh, kw]   (tap-major K, matches im2col)
    a = jnp.transpose(w, (0, 2, 3, 4, 1)).reshape(cout, 27 * cin)
    a = a * scale[:, None]                         # fold BN scale into rows
    return {"w": a.astype(jnp.bfloat16), "bias": bias}


def init_deconv_layer(key, cin, cout):
    k_conv, k_bn = jax.random.split(key)
    # PyTorch ConvTranspose3d weight: (Cin, Cout, kD, kH, kW)
    wt = 0.05 * jax.random.normal(k_conv, (cin, cout, 3, 3, 3), jnp.float32)
    scale, bias = _bn_fold(k_bn, cout)
    w_phase = []
    for pd, ph, pw in itertools.product((0, 1), repeat=3):
        blocks = []
        for (_sd, kd) in _DECONV_DIM_TAPS[pd]:
            for (_sh, kh) in _DECONV_DIM_TAPS[ph]:
                for (_sw, kw_) in _DECONV_DIM_TAPS[pw]:
                    blocks.append(wt[:, :, kd, kh, kw_].T)   # (Cout, Cin)
        a = jnp.concatenate(blocks, axis=1) * scale[:, None]
        w_phase.append(a.astype(jnp.bfloat16))
    return {"w_phase": tuple(w_phase), "bias": bias}


def init_hourglass_params(key, inplanes):
    ks = jax.random.split(key, 6)
    c, c2 = inplanes, 2 * inplanes
    return {
        "conv1": init_conv_layer(ks[0], c, c2),
        "conv2": init_conv_layer(ks[1], c2, c2),
        "conv3": init_conv_layer(ks[2], c2, c2),
        "conv4": init_conv_layer(ks[3], c2, c2),
        "conv5": init_deconv_layer(ks[4], c2, c2),
        "conv6": init_deconv_layer(ks[5], c2, c),
    }


# ----------------------------------------------------------------------------
# hourglass forward (matches PyTorch semantics; presqu/postsqu taken in NCDHW)
# ----------------------------------------------------------------------------
def hourglass_forward(x_ncdhw, params, presqu=None, postsqu=None):
    to_cn = lambda t: jnp.transpose(t, (1, 0, 2, 3, 4))      # NCDHW -> CNDHW
    x = to_cn(x_ncdhw)
    postsqu_cn = to_cn(postsqu) if postsqu is not None else None
    presqu_cn = to_cn(presqu) if presqu is not None else None

    out = conv3d_bn(x, params["conv1"], stride=2, relu=True)            # conv1
    pre = conv3d_bn(out, params["conv2"], stride=1, relu=True,
                    residual_cn=postsqu_cn)                              # conv2 (+postsqu) relu
    out = conv3d_bn(pre, params["conv3"], stride=2, relu=True)           # conv3
    out = conv3d_bn(out, params["conv4"], stride=1, relu=True)           # conv4
    skip = presqu_cn if presqu_cn is not None else pre
    post = deconv3d_bn(out, params["conv5"], relu=True,
                       residual_cn=skip)                                 # conv5 (+skip) relu
    out = deconv3d_bn(post, params["conv6"], relu=False)                 # conv6

    to_ncdhw = lambda t: jnp.transpose(t, (1, 0, 2, 3, 4))   # CNDHW -> NCDHW
    return to_ncdhw(out), to_ncdhw(pre), to_ncdhw(post)


# ----------------------------------------------------------------------------
if __name__ == "__main__":
    inplanes = 4
    N, D, H, W = 2, 8, 16, 16            # PyTorch cost-volume input: NCDHW
    key = jax.random.PRNGKey(0)
    kx, kp = jax.random.split(key)

    x = jax.random.normal(kx, (N, inplanes, D, H, W), jnp.float32)
    params = init_hourglass_params(kp, inplanes)

    fwd = jax.jit(functools.partial(hourglass_forward,
                                    presqu=None, postsqu=None))
    out, pre, post = fwd(x, params)
    jax.block_until_ready((out, pre, post))

    assert out.shape == (N, inplanes, D, H, W), out.shape
    assert pre.shape == (N, 2 * inplanes, D // 2, H // 2, W // 2), pre.shape
    assert post.shape == (N, 2 * inplanes, D // 2, H // 2, W // 2), post.shape
    assert bool(jnp.all(jnp.isfinite(out)))
    assert bool(jnp.all(pre >= 0)) and bool(jnp.all(post >= 0))  # ReLU outputs

    print("KERNEL_OK")
</pallas_src>

<mosaic_0001>
module attributes {stable_mosaic.version = 11 : i64} {
  func.func @kernel(%arg0: i32, %arg1: memref<8x108xbf16, #tpu.memory_space<vmem>>, %arg2: memref<8x1xf32, #tpu.memory_space<vmem>>, %arg3: memref<108x512xbf16, #tpu.memory_space<vmem>>, %arg4: memref<8x512xf32, #tpu.memory_space<vmem>>) attributes {dimension_semantics = [#tpu.dimension_semantics<parallel>], iteration_bounds = array<i64: 1>, scalar_prefetch = 0 : i64, scratch_operands = 0 : i64, tpu.core_type = #tpu.core_type<tc>, window_params = [{pipeline_mode = #tpu.pipeline_mode<synchronous>, transform_indices = @transform_0, window_bounds = array<i64: 8, 108>}, {pipeline_mode = #tpu.pipeline_mode<synchronous>, transform_indices = @transform_1, window_bounds = array<i64: 8, 1>}, {transform_indices = @transform_2, window_bounds = array<i64: 108, 512>}, {transform_indices = @transform_3, window_bounds = array<i64: 8, 512>}]} {
    %c0 = arith.constant 0 : index
    %c0_0 = arith.constant 0 : index
    %0 = vector.load %arg1[%c0, %c0_0] : memref<8x108xbf16, #tpu.memory_space<vmem>>, vector<8x108xbf16>
    %c0_1 = arith.constant 0 : index
    %c0_2 = arith.constant 0 : index
    %1 = vector.load %arg3[%c0_1, %c0_2] : memref<108x512xbf16, #tpu.memory_space<vmem>>, vector<108x512xbf16>
    %cst = arith.constant dense<0.000000e+00> : vector<8x512xf32>
    %2 = tpu.matmul %0, %1, %cst {dimension_numbers = #tpu.dot_dimension_numbers<[1], [0], [0], [1], [0, 0, 1, 1], [], []>} : vector<8x108xbf16>, vector<108x512xbf16>, vector<8x512xf32> -> vector<8x512xf32>
    %c0_3 = arith.constant 0 : index
    %c0_4 = arith.constant 0 : index
    %3 = vector.load %arg2[%c0_3, %c0_4] : memref<8x1xf32, #tpu.memory_space<vmem>>, vector<8x1xf32>
    %4 = vector.broadcast %3 : vector<8x1xf32> to vector<8x512xf32>
    %5 = arith.addf %2, %4 : vector<8x512xf32>
    %cst_5 = arith.constant 0.000000e+00 : f32
    %6 = vector.broadcast %cst_5 : f32 to vector<8x512xf32>
    %7 = arith.maximumf %5, %6 : vector<8x512xf32>
    %c0_6 = arith.constant 0 : index
    %c0_7 = arith.constant 0 : index
    %8 = vector.load %arg4[%c0_6, %c0_7] : memref<8x512xf32, #tpu.memory_space<vmem>>, vector<8x512xf32>
    tpu.vector_store %arg4[%c0_6, %c0_7], %7 {strides = array<i32>} : memref<8x512xf32, #tpu.memory_space<vmem>>, vector<8x512xf32>,
    return
  }
  func.func @transform_0(%arg0: i32) -> (i32, i32) {
    %c0_i32 = arith.constant 0 : i32
    %c0_i32_0 = arith.constant 0 : i32
    %c0_i32_1 = arith.constant 0 : i32
    return %c0_i32, %c0_i32_0 : i32, i32
  }
  func.func @transform_1(%arg0: i32) -> (i32, i32) {
    %c0_i32 = arith.constant 0 : i32
    %c0_i32_0 = arith.constant 0 : i32
    %c0_i32_1 = arith.constant 0 : i32
    return %c0_i32, %c0_i32_0 : i32, i32
  }
  func.func @transform_2(%arg0: i32) -> (i32, i32) {
    %c0_i32 = arith.constant 0 : i32
    %c0_i32_0 = arith.constant 0 : i32
    return %c0_i32, %arg0 : i32, i32
  }
  func.func @transform_3(%arg0: i32) -> (i32, i32) {
    %c0_i32 = arith.constant 0 : i32
    %c0_i32_0 = arith.constant 0 : i32
    return %c0_i32, %arg0 : i32, i32
  }
}

module attributes {stable_mosaic.version = 11 : i64} {
  func.func @kernel(%arg0: i32, %arg1: memref<8x216xbf16, #tpu.memory_space<vmem>>, %arg2: memref<8x1xf32, #tpu.memory_space<vmem>>, %arg3: memref<216x512xbf16, #tpu.memory_space<vmem>>, %arg4: memref<8x512xf32, #tpu.memory_space<vmem>>) attributes {dimension_semantics = [#tpu.dimension_semantics<parallel>], iteration_bounds = array<i64: 1>, scalar_prefetch = 0 : i64, scratch_operands = 0 : i64, tpu.core_type = #tpu.core_type<tc>, window_params = [{pipeline_mode = #tpu.pipeline_mode<synchronous>, transform_indices = @transform_0, window_bounds = array<i64: 8, 216>}, {pipeline_mode = #tpu.pipeline_mode<synchronous>, transform_indices = @transform_1, window_bounds = array<i64: 8, 1>}, {transform_indices = @transform_2, window_bounds = array<i64: 216, 512>}, {transform_indices = @transform_3, window_bounds = array<i64: 8, 512>}]} {
    %c0 = arith.constant 0 : index
    %c0_0 = arith.constant 0 : index
    %0 = vector.load %arg1[%c0, %c0_0] : memref<8x216xbf16, #tpu.memory_space<vmem>>, vector<8x216xbf16>
    %c0_1 = arith.constant 0 : index
    %c0_2 = arith.constant 0 : index
    %1 = vector.load %arg3[%c0_1, %c0_2] : memref<216x512xbf16, #tpu.memory_space<vmem>>, vector<216x512xbf16>
    %cst = arith.constant dense<0.000000e+00> : vector<8x512xf32>
    %2 = tpu.matmul %0, %1, %cst {dimension_numbers = #tpu.dot_dimension_numbers<[1], [0], [0], [1], [0, 0, 1, 1], [], []>} : vector<8x216xbf16>, vector<216x512xbf16>, vector<8x512xf32> -> vector<8x512xf32>
    %c0_3 = arith.constant 0 : index
    %c0_4 = arith.constant 0 : index
    %3 = vector.load %arg2[%c0_3, %c0_4] : memref<8x1xf32, #tpu.memory_space<vmem>>, vector<8x1xf32>
    %4 = vector.broadcast %3 : vector<8x1xf32> to vector<8x512xf32>
    %5 = arith.addf %2, %4 : vector<8x512xf32>
    %cst_5 = arith.constant 0.000000e+00 : f32
    %6 = vector.broadcast %cst_5 : f32 to vector<8x512xf32>
    %7 = arith.maximumf %5, %6 : vector<8x512xf32>
    %c0_6 = arith.constant 0 : index
    %c0_7 = arith.constant 0 : index
    %8 = vector.load %arg4[%c0_6, %c0_7] : memref<8x512xf32, #tpu.memory_space<vmem>>, vector<8x512xf32>
    tpu.vector_store %arg4[%c0_6, %c0_7], %7 {strides = array<i32>} : memref<8x512xf32, #tpu.memory_space<vmem>>, vector<8x512xf32>,
    return
  }
  func.func @transform_0(%arg0: i32) -> (i32, i32) {
    %c0_i32 = arith.constant 0 : i32
    %c0_i32_0 = arith.constant 0 : i32
    %c0_i32_1 = arith.constant 0 : i32
    return %c0_i32, %c0_i32_0 : i32, i32
  }
  func.func @transform_1(%arg0: i32) -> (i32, i32) {
    %c0_i32 = arith.constant 0 : i32
    %c0_i32_0 = arith.constant 0 : i32
    %c0_i32_1 = arith.constant 0 : i32
    return %c0_i32, %c0_i32_0 : i32, i32
  }
  func.func @transform_2(%arg0: i32) -> (i32, i32) {
    %c0_i32 = arith.constant 0 : i32
    %c0_i32_0 = arith.constant 0 : i32
    return %c0_i32, %arg0 : i32, i32
  }
  func.func @transform_3(%arg0: i32) -> (i32, i32) {
    %c0_i32 = arith.constant 0 : i32
    %c0_i32_0 = arith.constant 0 : i32
    return %c0_i32, %arg0 : i32, i32
  }
}

module attributes {stable_mosaic.version = 11 : i64} {
  func.func @kernel(%arg0: i32, %arg1: memref<8x216xbf16, #tpu.memory_space<vmem>>, %arg2: memref<8x1xf32, #tpu.memory_space<vmem>>, %arg3: memref<216x64xbf16, #tpu.memory_space<vmem>>, %arg4: memref<8x64xf32, #tpu.memory_space<vmem>>) attributes {dimension_semantics = [#tpu.dimension_semantics<parallel>], iteration_bounds = array<i64: 1>, scalar_prefetch = 0 : i64, scratch_operands = 0 : i64, tpu.core_type = #tpu.core_type<tc>, window_params = [{pipeline_mode = #tpu.pipeline_mode<synchronous>, transform_indices = @transform_0, window_bounds = array<i64: 8, 216>}, {pipeline_mode = #tpu.pipeline_mode<synchronous>, transform_indices = @transform_1, window_bounds = array<i64: 8, 1>}, {transform_indices = @transform_2, window_bounds = array<i64: 216, 64>}, {transform_indices = @transform_3, window_bounds = array<i64: 8, 64>}]} {
    %c0 = arith.constant 0 : index
    %c0_0 = arith.constant 0 : index
    %0 = vector.load %arg1[%c0, %c0_0] : memref<8x216xbf16, #tpu.memory_space<vmem>>, vector<8x216xbf16>
    %c0_1 = arith.constant 0 : index
    %c0_2 = arith.constant 0 : index
    %1 = vector.load %arg3[%c0_1, %c0_2] : memref<216x64xbf16, #tpu.memory_space<vmem>>, vector<216x64xbf16>
    %cst = arith.constant dense<0.000000e+00> : vector<8x64xf32>
    %2 = tpu.matmul %0, %1, %cst {dimension_numbers = #tpu.dot_dimension_numbers<[1], [0], [0], [1], [0, 0, 1, 1], [], []>} : vector<8x216xbf16>, vector<216x64xbf16>, vector<8x64xf32> -> vector<8x64xf32>
    %c0_3 = arith.constant 0 : index
    %c0_4 = arith.constant 0 : index
    %3 = vector.load %arg2[%c0_3, %c0_4] : memref<8x1xf32, #tpu.memory_space<vmem>>, vector<8x1xf32>
    %4 = vector.broadcast %3 : vector<8x1xf32> to vector<8x64xf32>
    %5 = arith.addf %2, %4 : vector<8x64xf32>
    %cst_5 = arith.constant 0.000000e+00 : f32
    %6 = vector.broadcast %cst_5 : f32 to vector<8x64xf32>
    %7 = arith.maximumf %5, %6 : vector<8x64xf32>
    %c0_6 = arith.constant 0 : index
    %c0_7 = arith.constant 0 : index
    %8 = vector.load %arg4[%c0_6, %c0_7] : memref<8x64xf32, #tpu.memory_space<vmem>>, vector<8x64xf32>
    tpu.vector_store %arg4[%c0_6, %c0_7], %7 {strides = array<i32>} : memref<8x64xf32, #tpu.memory_space<vmem>>, vector<8x64xf32>,
    return
  }
  func.func @transform_0(%arg0: i32) -> (i32, i32) {
    %c0_i32 = arith.constant 0 : i32
    %c0_i32_0 = arith.constant 0 : i32
    %c0_i32_1 = arith.constant 0 : i32
    return %c0_i32, %c0_i32_0 : i32, i32
  }
  func.func @transform_1(%arg0: i32) -> (i32, i32) {
    %c0_i32 = arith.constant 0 : i32
    %c0_i32_0 = arith.constant 0 : i32
    %c0_i32_1 = arith.constant 0 : i32
    return %c0_i32, %c0_i32_0 : i32, i32
  }
  func.func @transform_2(%arg0: i32) -> (i32, i32) {
    %c0_i32 = arith.constant 0 : i32
    %c0_i32_0 = arith.constant 0 : i32
    return %c0_i32, %arg0 : i32, i32
  }
  func.func @transform_3(%arg0: i32) -> (i32, i32) {
    %c0_i32 = arith.constant 0 : i32
    %c0_i32_0 = arith.constant 0 : i32
    return %c0_i32, %arg0 : i32, i32
  }
}

module attributes {stable_mosaic.version = 11 : i64} {
  func.func @kernel(%arg0: i32, %arg1: memref<8x8xbf16, #tpu.memory_space<vmem>>, %arg2: memref<8x1xf32, #tpu.memory_space<vmem>>, %arg3: memref<8x64xbf16, #tpu.memory_space<vmem>>, %arg4: memref<8x64xf32, #tpu.memory_space<vmem>>, %arg5: memref<8x64xf32, #tpu.memory_space<vmem>>) attributes {dimension_semantics = [#tpu.dimension_semantics<parallel>], iteration_bounds = array<i64: 1>, scalar_prefetch = 0 : i64, scratch_operands = 0 : i64, tpu.core_type = #tpu.core_type<tc>, window_params = [{pipeline_mode = #tpu.pipeline_mode<synchronous>, transform_indices = @transform_0, window_bounds = array<i64: 8, 8>}, {pipeline_mode = #tpu.pipeline_mode<synchronous>, transform_indices = @transform_1, window_bounds = array<i64: 8, 1>}, {transform_indices = @transform_2, window_bounds = array<i64: 8, 64>}, {transform_indices = @transform_3, window_bounds = array<i64: 8, 64>}, {transform_indices = @transform_4, window_bounds = array<i64: 8, 64>}]} {
    %c0 = arith.constant 0 : index
    %c0_0 = arith.constant 0 : index
    %0 = vector.load %arg1[%c0, %c0_0] : memref<8x8xbf16, #tpu.memory_space<vmem>>, vector<8x8xbf16>
    %c0_1 = arith.constant 0 : index
    %c0_2 = arith.constant 0 : index
    %1 = vector.load %arg3[%c0_1, %c0_2] : memref<8x64xbf16, #tpu.memory_space<vmem>>, vector<8x64xbf16>
    %cst = arith.constant dense<0.000000e+00> : vector<8x64xf32>
    %2 = tpu.matmul %0, %1, %cst {dimension_numbers = #tpu.dot_dimension_numbers<[1], [0], [0], [1], [0, 0, 1, 1], [], []>} : vector<8x8xbf16>, vector<8x64xbf16>, vector<8x64xf32> -> vector<8x64xf32>
    %c0_3 = arith.constant 0 : index
    %c0_4 = arith.constant 0 : index
    %3 = vector.load %arg2[%c0_3, %c0_4] : memref<8x1xf32, #tpu.memory_space<vmem>>, vector<8x1xf32>
    %4 = vector.broadcast %3 : vector<8x1xf32> to vector<8x64xf32>
    %5 = arith.addf %2, %4 : vector<8x64xf32>
    %c0_5 = arith.constant 0 : index
    %c0_6 = arith.constant 0 : index
    %6 = vector.load %arg4[%c0_5, %c0_6] : memref<8x64xf32, #tpu.memory_space<vmem>>, vector<8x64xf32>
    %7 = arith.addf %5, %6 : vector<8x64xf32>
    %cst_7 = arith.constant 0.000000e+00 : f32
    %8 = vector.broadcast %cst_7 : f32 to vector<8x64xf32>
    %9 = arith.maximumf %7, %8 : vector<8x64xf32>
    %c0_8 = arith.constant 0 : index
    %c0_9 = arith.constant 0 : index
    %10 = vector.load %arg5[%c0_8, %c0_9] : memref<8x64xf32, #tpu.memory_space<vmem>>, vector<8x64xf32>
    tpu.vector_store %arg5[%c0_8, %c0_9], %9 {strides = array<i32>} : memref<8x64xf32, #tpu.memory_space<vmem>>, vector<8x64xf32>,
    return
  }
  func.func @transform_0(%arg0: i32) -> (i32, i32) {
    %c0_i32 = arith.constant 0 : i32
    %c0_i32_0 = arith.constant 0 : i32
    %c0_i32_1 = arith.constant 0 : i32
    return %c0_i32, %c0_i32_0 : i32, i32
  }
  func.func @transform_1(%arg0: i32) -> (i32, i32) {
    %c0_i32 = arith.constant 0 : i32
    %c0_i32_0 = arith.constant 0 : i32
    %c0_i32_1 = arith.constant 0 : i32
    return %c0_i32, %c0_i32_0 : i32, i32
  }
  func.func @transform_2(%arg0: i32) -> (i32, i32) {
    %c0_i32 = arith.constant 0 : i32
    %c0_i32_0 = arith.constant 0 : i32
    return %c0_i32, %arg0 : i32, i32
  }
  func.func @transform_3(%arg0: i32) -> (i32, i32) {
    %c0_i32 = arith.constant 0 : i32
    %c0_i32_0 = arith.constant 0 : i32
    return %c0_i32, %arg0 : i32, i32
  }
  func.func @transform_4(%arg0: i32) -> (i32, i32) {
    %c0_i32 = arith.constant 0 : i32
    %c0_i32_0 = arith.constant 0 : i32
    return %c0_i32, %arg0 : i32, i32
  }
}

module attributes {stable_mosaic.version = 11 : i64} {
  func.func @kernel(%arg0: i32, %arg1: memref<8x64xbf16, #tpu.memory_space<vmem>>, %arg2: memref<8x1xf32, #tpu.memory_space<vmem>>, %arg3: memref<64x64xbf16, #tpu.memory_space<vmem>>, %arg4: memref<8x64xf32, #tpu.memory_space<vmem>>, %arg5: memref<8x64xf32, #tpu.memory_space<vmem>>) attributes {dimension_semantics = [#tpu.dimension_semantics<parallel>], iteration_bounds = array<i64: 1>, scalar_prefetch = 0 : i64, scratch_operands = 0 : i64, tpu.core_type = #tpu.core_type<tc>, window_params = [{pipeline_mode = #tpu.pipeline_mode<synchronous>, transform_indices = @transform_0, window_bounds = array<i64: 8, 64>}, {pipeline_mode = #tpu.pipeline_mode<synchronous>, transform_indices = @transform_1, window_bounds = array<i64: 8, 1>}, {transform_indices = @transform_2, window_bounds = array<i64: 64, 64>}, {transform_indices = @transform_3, window_bounds = array<i64: 8, 64>}, {transform_indices = @transform_4, window_bounds = array<i64: 8, 64>}]} {
    %c0 = arith.constant 0 : index
    %c0_0 = arith.constant 0 : index
    %0 = vector.load %arg1[%c0, %c0_0] : memref<8x64xbf16, #tpu.memory_space<vmem>>, vector<8x64xbf16>
    %c0_1 = arith.constant 0 : index
    %c0_2 = arith.constant 0 : index
    %1 = vector.load %arg3[%c0_1, %c0_2] : memref<64x64xbf16, #tpu.memory_space<vmem>>, vector<64x64xbf16>
    %cst = arith.constant dense<0.000000e+00> : vector<8x64xf32>
    %2 = tpu.matmul %0, %1, %cst {dimension_numbers = #tpu.dot_dimension_numbers<[1], [0], [0], [1], [0, 0, 1, 1], [], []>} : vector<8x64xbf16>, vector<64x64xbf16>, vector<8x64xf32> -> vector<8x64xf32>
    %c0_3 = arith.constant 0 : index
    %c0_4 = arith.constant 0 : index
    %3 = vector.load %arg2[%c0_3, %c0_4] : memref<8x1xf32, #tpu.memory_space<vmem>>, vector<8x1xf32>
    %4 = vector.broadcast %3 : vector<8x1xf32> to vector<8x64xf32>
    %5 = arith.addf %2, %4 : vector<8x64xf32>
    %c0_5 = arith.constant 0 : index
    %c0_6 = arith.constant 0 : index
    %6 = vector.load %arg4[%c0_5, %c0_6] : memref<8x64xf32, #tpu.memory_space<vmem>>, vector<8x64xf32>
    %7 = arith.addf %5, %6 : vector<8x64xf32>
    %cst_7 = arith.constant 0.000000e+00 : f32
    %8 = vector.broadcast %cst_7 : f32 to vector<8x64xf32>
    %9 = arith.maximumf %7, %8 : vector<8x64xf32>
    %c0_8 = arith.constant 0 : index
    %c0_9 = arith.constant 0 : index
    %10 = vector.load %arg5[%c0_8, %c0_9] : memref<8x64xf32, #tpu.memory_space<vmem>>, vector<8x64xf32>
    tpu.vector_store %arg5[%c0_8, %c0_9], %9 {strides = array<i32>} : memref<8x64xf32, #tpu.memory_space<vmem>>, vector<8x64xf32>,
    return
  }
  func.func @transform_0(%arg0: i32) -> (i32, i32) {
    %c0_i32 = arith.constant 0 : i32
    %c0_i32_0 = arith.constant 0 : i32
    %c0_i32_1 = arith.constant 0 : i32
    return %c0_i32, %c0_i32_0 : i32, i32
  }
  func.func @transform_1(%arg0: i32) -> (i32, i32) {
    %c0_i32 = arith.constant 0 : i32
    %c0_i32_0 = arith.constant 0 : i32
    %c0_i32_1 = arith.constant 0 : i32
    return %c0_i32, %c0_i32_0 : i32, i32
  }
  func.func @transform_2(%arg0: i32) -> (i32, i32) {
    %c0_i32 = arith.constant 0 : i32
    %c0_i32_0 = arith.constant 0 : i32
    return %c0_i32, %arg0 : i32, i32
  }
  func.func @transform_3(%arg0: i32) -> (i32, i32) {
    %c0_i32 = arith.constant 0 : i32
    %c0_i32_0 = arith.constant 0 : i32
    return %c0_i32, %arg0 : i32, i32
  }
  func.func @transform_4(%arg0: i32) -> (i32, i32) {
    %c0_i32 = arith.constant 0 : i32
    %c0_i32_0 = arith.constant 0 : i32
    return %c0_i32, %arg0 : i32, i32
  }
}

module attributes {stable_mosaic.version = 11 : i64} {
  func.func @kernel(%arg0: i32, %arg1: memref<8x16xbf16, #tpu.memory_space<vmem>>, %arg2: memref<8x1xf32, #tpu.memory_space<vmem>>, %arg3: memref<16x64xbf16, #tpu.memory_space<vmem>>, %arg4: memref<8x64xf32, #tpu.memory_space<vmem>>, %arg5: memref<8x64xf32, #tpu.memory_space<vmem>>) attributes {dimension_semantics = [#tpu.dimension_semantics<parallel>], iteration_bounds = array<i64: 1>, scalar_prefetch = 0 : i64, scratch_operands = 0 : i64, tpu.core_type = #tpu.core_type<tc>, window_params = [{pipeline_mode = #tpu.pipeline_mode<synchronous>, transform_indices = @transform_0, window_bounds = array<i64: 8, 16>}, {pipeline_mode = #tpu.pipeline_mode<synchronous>, transform_indices = @transform_1, window_bounds = array<i64: 8, 1>}, {transform_indices = @transform_2, window_bounds = array<i64: 16, 64>}, {transform_indices = @transform_3, window_bounds = array<i64: 8, 64>}, {transform_indices = @transform_4, window_bounds = array<i64: 8, 64>}]} {
    %c0 = arith.constant 0 : index
    %c0_0 = arith.constant 0 : index
    %0 = vector.load %arg1[%c0, %c0_0] : memref<8x16xbf16, #tpu.memory_space<vmem>>, vector<8x16xbf16>
    %c0_1 = arith.constant 0 : index
    %c0_2 = arith.constant 0 : index
    %1 = vector.load %arg3[%c0_1, %c0_2] : memref<16x64xbf16, #tpu.memory_space<vmem>>, vector<16x64xbf16>
    %cst = arith.constant dense<0.000000e+00> : vector<8x64xf32>
    %2 = tpu.matmul %0, %1, %cst {dimension_numbers = #tpu.dot_dimension_numbers<[1], [0], [0], [1], [0, 0, 1, 1], [], []>} : vector<8x16xbf16>, vector<16x64xbf16>, vector<8x64xf32> -> vector<8x64xf32>
    %c0_3 = arith.constant 0 : index
    %c0_4 = arith.constant 0 : index
    %3 = vector.load %arg2[%c0_3, %c0_4] : memref<8x1xf32, #tpu.memory_space<vmem>>, vector<8x1xf32>
    %4 = vector.broadcast %3 : vector<8x1xf32> to vector<8x64xf32>
    %5 = arith.addf %2, %4 : vector<8x64xf32>
    %c0_5 = arith.constant 0 : index
    %c0_6 = arith.constant 0 : index
    %6 = vector.load %arg4[%c0_5, %c0_6] : memref<8x64xf32, #tpu.memory_space<vmem>>, vector<8x64xf32>
    %7 = arith.addf %5, %6 : vector<8x64xf32>
    %cst_7 = arith.constant 0.000000e+00 : f32
    %8 = vector.broadcast %cst_7 : f32 to vector<8x64xf32>
    %9 = arith.maximumf %7, %8 : vector<8x64xf32>
    %c0_8 = arith.constant 0 : index
    %c0_9 = arith.constant 0 : index
    %10 = vector.load %arg5[%c0_8, %c0_9] : memref<8x64xf32, #tpu.memory_space<vmem>>, vector<8x64xf32>
    tpu.vector_store %arg5[%c0_8, %c0_9], %9 {strides = array<i32>} : memref<8x64xf32, #tpu.memory_space<vmem>>, vector<8x64xf32>,
    return
  }
  func.func @transform_0(%arg0: i32) -> (i32, i32) {
    %c0_i32 = arith.constant 0 : i32
    %c0_i32_0 = arith.constant 0 : i32
    %c0_i32_1 = arith.constant 0 : i32
    return %c0_i32, %c0_i32_0 : i32, i32
  }
  func.func @transform_1(%arg0: i32) -> (i32, i32) {
    %c0_i32 = arith.constant 0 : i32
    %c0_i32_0 = arith.constant 0 : i32
    %c0_i32_1 = arith.constant 0 : i32
    return %c0_i32, %c0_i32_0 : i32, i32
  }
  func.func @transform_2(%arg0: i32) -> (i32, i32) {
    %c0_i32 = arith.constant 0 : i32
    %c0_i32_0 = arith.constant 0 : i32
    return %c0_i32, %arg0 : i32, i32
  }
  func.func @transform_3(%arg0: i32) -> (i32, i32) {
    %c0_i32 = arith.constant 0 : i32
    %c0_i32_0 = arith.constant 0 : i32
    return %c0_i32, %arg0 : i32, i32
  }
  func.func @transform_4(%arg0: i32) -> (i32, i32) {
    %c0_i32 = arith.constant 0 : i32
    %c0_i32_0 = arith.constant 0 : i32
    return %c0_i32, %arg0 : i32, i32
  }
}

module attributes {stable_mosaic.version = 11 : i64} {
  func.func @kernel(%arg0: i32, %arg1: memref<8x32xbf16, #tpu.memory_space<vmem>>, %arg2: memref<8x1xf32, #tpu.memory_space<vmem>>, %arg3: memref<32x64xbf16, #tpu.memory_space<vmem>>, %arg4: memref<8x64xf32, #tpu.memory_space<vmem>>, %arg5: memref<8x64xf32, #tpu.memory_space<vmem>>) attributes {dimension_semantics = [#tpu.dimension_semantics<parallel>], iteration_bounds = array<i64: 1>, scalar_prefetch = 0 : i64, scratch_operands = 0 : i64, tpu.core_type = #tpu.core_type<tc>, window_params = [{pipeline_mode = #tpu.pipeline_mode<synchronous>, transform_indices = @transform_0, window_bounds = array<i64: 8, 32>}, {pipeline_mode = #tpu.pipeline_mode<synchronous>, transform_indices = @transform_1, window_bounds = array<i64: 8, 1>}, {transform_indices = @transform_2, window_bounds = array<i64: 32, 64>}, {transform_indices = @transform_3, window_bounds = array<i64: 8, 64>}, {transform_indices = @transform_4, window_bounds = array<i64: 8, 64>}]} {
    %c0 = arith.constant 0 : index
    %c0_0 = arith.constant 0 : index
    %0 = vector.load %arg1[%c0, %c0_0] : memref<8x32xbf16, #tpu.memory_space<vmem>>, vector<8x32xbf16>
    %c0_1 = arith.constant 0 : index
    %c0_2 = arith.constant 0 : index
    %1 = vector.load %arg3[%c0_1, %c0_2] : memref<32x64xbf16, #tpu.memory_space<vmem>>, vector<32x64xbf16>
    %cst = arith.constant dense<0.000000e+00> : vector<8x64xf32>
    %2 = tpu.matmul %0, %1, %cst {dimension_numbers = #tpu.dot_dimension_numbers<[1], [0], [0], [1], [0, 0, 1, 1], [], []>} : vector<8x32xbf16>, vector<32x64xbf16>, vector<8x64xf32> -> vector<8x64xf32>
    %c0_3 = arith.constant 0 : index
    %c0_4 = arith.constant 0 : index
    %3 = vector.load %arg2[%c0_3, %c0_4] : memref<8x1xf32, #tpu.memory_space<vmem>>, vector<8x1xf32>
    %4 = vector.broadcast %3 : vector<8x1xf32> to vector<8x64xf32>
    %5 = arith.addf %2, %4 : vector<8x64xf32>
    %c0_5 = arith.constant 0 : index
    %c0_6 = arith.constant 0 : index
    %6 = vector.load %arg4[%c0_5, %c0_6] : memref<8x64xf32, #tpu.memory_space<vmem>>, vector<8x64xf32>
    %7 = arith.addf %5, %6 : vector<8x64xf32>
    %cst_7 = arith.constant 0.000000e+00 : f32
    %8 = vector.broadcast %cst_7 : f32 to vector<8x64xf32>
    %9 = arith.maximumf %7, %8 : vector<8x64xf32>
    %c0_8 = arith.constant 0 : index
    %c0_9 = arith.constant 0 : index
    %10 = vector.load %arg5[%c0_8, %c0_9] : memref<8x64xf32, #tpu.memory_space<vmem>>, vector<8x64xf32>
    tpu.vector_store %arg5[%c0_8, %c0_9], %9 {strides = array<i32>} : memref<8x64xf32, #tpu.memory_space<vmem>>, vector<8x64xf32>,
    return
  }
  func.func @transform_0(%arg0: i32) -> (i32, i32) {
    %c0_i32 = arith.constant 0 : i32
    %c0_i32_0 = arith.constant 0 : i32
    %c0_i32_1 = arith.constant 0 : i32
    return %c0_i32, %c0_i32_0 : i32, i32
  }
  func.func @transform_1(%arg0: i32) -> (i32, i32) {
    %c0_i32 = arith.constant 0 : i32
    %c0_i32_0 = arith.constant 0 : i32
    %c0_i32_1 = arith.constant 0 : i32
    return %c0_i32, %c0_i32_0 : i32, i32
  }
  func.func @transform_2(%arg0: i32) -> (i32, i32) {
    %c0_i32 = arith.constant 0 : i32
    %c0_i32_0 = arith.constant 0 : i32
    return %c0_i32, %arg0 : i32, i32
  }
  func.func @transform_3(%arg0: i32) -> (i32, i32) {
    %c0_i32 = arith.constant 0 : i32
    %c0_i32_0 = arith.constant 0 : i32
    return %c0_i32, %arg0 : i32, i32
  }
  func.func @transform_4(%arg0: i32) -> (i32, i32) {
    %c0_i32 = arith.constant 0 : i32
    %c0_i32_0 = arith.constant 0 : i32
    return %c0_i32, %arg0 : i32, i32
  }
}

module attributes {stable_mosaic.version = 11 : i64} {
  func.func @kernel(%arg0: i32, %arg1: memref<4x8xbf16, #tpu.memory_space<vmem>>, %arg2: memref<4x1xf32, #tpu.memory_space<vmem>>, %arg3: memref<8x512xbf16, #tpu.memory_space<vmem>>, %arg4: memref<4x512xf32, #tpu.memory_space<vmem>>) attributes {dimension_semantics = [#tpu.dimension_semantics<parallel>], iteration_bounds = array<i64: 1>, scalar_prefetch = 0 : i64, scratch_operands = 0 : i64, tpu.core_type = #tpu.core_type<tc>, window_params = [{pipeline_mode = #tpu.pipeline_mode<synchronous>, transform_indices = @transform_0, window_bounds = array<i64: 4, 8>}, {pipeline_mode = #tpu.pipeline_mode<synchronous>, transform_indices = @transform_1, window_bounds = array<i64: 4, 1>}, {transform_indices = @transform_2, window_bounds = array<i64: 8, 512>}, {transform_indices = @transform_3, window_bounds = array<i64: 4, 512>}]} {
    %c0 = arith.constant 0 : index
    %c0_0 = arith.constant 0 : index
    %0 = vector.load %arg1[%c0, %c0_0] : memref<4x8xbf16, #tpu.memory_space<vmem>>, vector<4x8xbf16>
    %c0_1 = arith.constant 0 : index
    %c0_2 = arith.constant 0 : index
    %1 = vector.load %arg3[%c0_1, %c0_2] : memref<8x512xbf16, #tpu.memory_space<vmem>>, vector<8x512xbf16>
    %cst = arith.constant dense<0.000000e+00> : vector<4x512xf32>
    %2 = tpu.matmul %0, %1, %cst {dimension_numbers = #tpu.dot_dimension_numbers<[1], [0], [0], [1], [0, 0, 1, 1], [], []>} : vector<4x8xbf16>, vector<8x512xbf16>, vector<4x512xf32> -> vector<4x512xf32>
    %c0_3 = arith.constant 0 : index
    %c0_4 = arith.constant 0 : index
    %3 = vector.load %arg2[%c0_3, %c0_4] : memref<4x1xf32, #tpu.memory_space<vmem>>, vector<4x1xf32>
    %4 = vector.broadcast %3 : vector<4x1xf32> to vector<4x512xf32>
    %5 = arith.addf %2, %4 : vector<4x512xf32>
    %c0_5 = arith.constant 0 : index
    %c0_6 = arith.constant 0 : index
    %6 = vector.load %arg4[%c0_5, %c0_6] : memref<4x512xf32, #tpu.memory_space<vmem>>, vector<4x512xf32>
    tpu.vector_store %arg4[%c0_5, %c0_6], %5 {strides = array<i32>} : memref<4x512xf32, #tpu.memory_space<vmem>>, vector<4x512xf32>,
    return
  }
  func.func @transform_0(%arg0: i32) -> (i32, i32) {
    %c0_i32 = arith.constant 0 : i32
    %c0_i32_0 = arith.constant 0 : i32
    %c0_i32_1 = arith.constant 0 : i32
    return %c0_i32, %c0_i32_0 : i32, i32
  }
  func.func @transform_1(%arg0: i32) -> (i32, i32) {
    %c0_i32 = arith.constant 0 : i32
    %c0_i32_0 = arith.constant 0 : i32
    %c0_i32_1 = arith.constant 0 : i32
    return %c0_i32, %c0_i32_0 : i32, i32
  }
  func.func @transform_2(%arg0: i32) -> (i32, i32) {
    %c0_i32 = arith.constant 0 : i32
    %c0_i32_0 = arith.constant 0 : i32
    return %c0_i32, %arg0 : i32, i32
  }
  func.func @transform_3(%arg0: i32) -> (i32, i32) {
    %c0_i32 = arith.constant 0 : i32
    %c0_i32_0 = arith.constant 0 : i32
    return %c0_i32, %arg0 : i32, i32
  }
}

module attributes {stable_mosaic.version = 11 : i64} {
  func.func @kernel(%arg0: i32, %arg1: memref<4x64xbf16, #tpu.memory_space<vmem>>, %arg2: memref<4x1xf32, #tpu.memory_space<vmem>>, %arg3: memref<64x512xbf16, #tpu.memory_space<vmem>>, %arg4: memref<4x512xf32, #tpu.memory_space<vmem>>) attributes {dimension_semantics = [#tpu.dimension_semantics<parallel>], iteration_bounds = array<i64: 1>, scalar_prefetch = 0 : i64, scratch_operands = 0 : i64, tpu.core_type = #tpu.core_type<tc>, window_params = [{pipeline_mode = #tpu.pipeline_mode<synchronous>, transform_indices = @transform_0, window_bounds = array<i64: 4, 64>}, {pipeline_mode = #tpu.pipeline_mode<synchronous>, transform_indices = @transform_1, window_bounds = array<i64: 4, 1>}, {transform_indices = @transform_2, window_bounds = array<i64: 64, 512>}, {transform_indices = @transform_3, window_bounds = array<i64: 4, 512>}]} {
    %c0 = arith.constant 0 : index
    %c0_0 = arith.constant 0 : index
    %0 = vector.load %arg1[%c0, %c0_0] : memref<4x64xbf16, #tpu.memory_space<vmem>>, vector<4x64xbf16>
    %c0_1 = arith.constant 0 : index
    %c0_2 = arith.constant 0 : index
    %1 = vector.load %arg3[%c0_1, %c0_2] : memref<64x512xbf16, #tpu.memory_space<vmem>>, vector<64x512xbf16>
    %cst = arith.constant dense<0.000000e+00> : vector<4x512xf32>
    %2 = tpu.matmul %0, %1, %cst {dimension_numbers = #tpu.dot_dimension_numbers<[1], [0], [0], [1], [0, 0, 1, 1], [], []>} : vector<4x64xbf16>, vector<64x512xbf16>, vector<4x512xf32> -> vector<4x512xf32>
    %c0_3 = arith.constant 0 : index
    %c0_4 = arith.constant 0 : index
    %3 = vector.load %arg2[%c0_3, %c0_4] : memref<4x1xf32, #tpu.memory_space<vmem>>, vector<4x1xf32>
    %4 = vector.broadcast %3 : vector<4x1xf32> to vector<4x512xf32>
    %5 = arith.addf %2, %4 : vector<4x512xf32>
    %c0_5 = arith.constant 0 : index
    %c0_6 = arith.constant 0 : index
    %6 = vector.load %arg4[%c0_5, %c0_6] : memref<4x512xf32, #tpu.memory_space<vmem>>, vector<4x512xf32>
    tpu.vector_store %arg4[%c0_5, %c0_6], %5 {strides = array<i32>} : memref<4x512xf32, #tpu.memory_space<vmem>>, vector<4x512xf32>,
    return
  }
  func.func @transform_0(%arg0: i32) -> (i32, i32) {
    %c0_i32 = arith.constant 0 : i32
    %c0_i32_0 = arith.constant 0 : i32
    %c0_i32_1 = arith.constant 0 : i32
    return %c0_i32, %c0_i32_0 : i32, i32
  }
  func.func @transform_1(%arg0: i32) -> (i32, i32) {
    %c0_i32 = arith.constant 0 : i32
    %c0_i32_0 = arith.constant 0 : i32
    %c0_i32_1 = arith.constant 0 : i32
    return %c0_i32, %c0_i32_0 : i32, i32
  }
  func.func @transform_2(%arg0: i32) -> (i32, i32) {
    %c0_i32 = arith.constant 0 : i32
    %c0_i32_0 = arith.constant 0 : i32
    return %c0_i32, %arg0 : i32, i32
  }
  func.func @transform_3(%arg0: i32) -> (i32, i32) {
    %c0_i32 = arith.constant 0 : i32
    %c0_i32_0 = arith.constant 0 : i32
    return %c0_i32, %arg0 : i32, i32
  }
}

module attributes {stable_mosaic.version = 11 : i64} {
  func.func @kernel(%arg0: i32, %arg1: memref<4x16xbf16, #tpu.memory_space<vmem>>, %arg2: memref<4x1xf32, #tpu.memory_space<vmem>>, %arg3: memref<16x512xbf16, #tpu.memory_space<vmem>>, %arg4: memref<4x512xf32, #tpu.memory_space<vmem>>) attributes {dimension_semantics = [#tpu.dimension_semantics<parallel>], iteration_bounds = array<i64: 1>, scalar_prefetch = 0 : i64, scratch_operands = 0 : i64, tpu.core_type = #tpu.core_type<tc>, window_params = [{pipeline_mode = #tpu.pipeline_mode<synchronous>, transform_indices = @transform_0, window_bounds = array<i64: 4, 16>}, {pipeline_mode = #tpu.pipeline_mode<synchronous>, transform_indices = @transform_1, window_bounds = array<i64: 4, 1>}, {transform_indices = @transform_2, window_bounds = array<i64: 16, 512>}, {transform_indices = @transform_3, window_bounds = array<i64: 4, 512>}]} {
    %c0 = arith.constant 0 : index
    %c0_0 = arith.constant 0 : index
    %0 = vector.load %arg1[%c0, %c0_0] : memref<4x16xbf16, #tpu.memory_space<vmem>>, vector<4x16xbf16>
    %c0_1 = arith.constant 0 : index
    %c0_2 = arith.constant 0 : index
    %1 = vector.load %arg3[%c0_1, %c0_2] : memref<16x512xbf16, #tpu.memory_space<vmem>>, vector<16x512xbf16>
    %cst = arith.constant dense<0.000000e+00> : vector<4x512xf32>
    %2 = tpu.matmul %0, %1, %cst {dimension_numbers = #tpu.dot_dimension_numbers<[1], [0], [0], [1], [0, 0, 1, 1], [], []>} : vector<4x16xbf16>, vector<16x512xbf16>, vector<4x512xf32> -> vector<4x512xf32>
    %c0_3 = arith.constant 0 : index
    %c0_4 = arith.constant 0 : index
    %3 = vector.load %arg2[%c0_3, %c0_4] : memref<4x1xf32, #tpu.memory_space<vmem>>, vector<4x1xf32>
    %4 = vector.broadcast %3 : vector<4x1xf32> to vector<4x512xf32>
    %5 = arith.addf %2, %4 : vector<4x512xf32>
    %c0_5 = arith.constant 0 : index
    %c0_6 = arith.constant 0 : index
    %6 = vector.load %arg4[%c0_5, %c0_6] : memref<4x512xf32, #tpu.memory_space<vmem>>, vector<4x512xf32>
    tpu.vector_store %arg4[%c0_5, %c0_6], %5 {strides = array<i32>} : memref<4x512xf32, #tpu.memory_space<vmem>>, vector<4x512xf32>,
    return
  }
  func.func @transform_0(%arg0: i32) -> (i32, i32) {
    %c0_i32 = arith.constant 0 : i32
    %c0_i32_0 = arith.constant 0 : i32
    %c0_i32_1 = arith.constant 0 : i32
    return %c0_i32, %c0_i32_0 : i32, i32
  }
  func.func @transform_1(%arg0: i32) -> (i32, i32) {
    %c0_i32 = arith.constant 0 : i32
    %c0_i32_0 = arith.constant 0 : i32
    %c0_i32_1 = arith.constant 0 : i32
    return %c0_i32, %c0_i32_0 : i32, i32
  }
  func.func @transform_2(%arg0: i32) -> (i32, i32) {
    %c0_i32 = arith.constant 0 : i32
    %c0_i32_0 = arith.constant 0 : i32
    return %c0_i32, %arg0 : i32, i32
  }
  func.func @transform_3(%arg0: i32) -> (i32, i32) {
    %c0_i32 = arith.constant 0 : i32
    %c0_i32_0 = arith.constant 0 : i32
    return %c0_i32, %arg0 : i32, i32
  }
}

module attributes {stable_mosaic.version = 11 : i64} {
  func.func @kernel(%arg0: i32, %arg1: memref<4x32xbf16, #tpu.memory_space<vmem>>, %arg2: memref<4x1xf32, #tpu.memory_space<vmem>>, %arg3: memref<32x512xbf16, #tpu.memory_space<vmem>>, %arg4: memref<4x512xf32, #tpu.memory_space<vmem>>) attributes {dimension_semantics = [#tpu.dimension_semantics<parallel>], iteration_bounds = array<i64: 1>, scalar_prefetch = 0 : i64, scratch_operands = 0 : i64, tpu.core_type = #tpu.core_type<tc>, window_params = [{pipeline_mode = #tpu.pipeline_mode<synchronous>, transform_indices = @transform_0, window_bounds = array<i64: 4, 32>}, {pipeline_mode = #tpu.pipeline_mode<synchronous>, transform_indices = @transform_1, window_bounds = array<i64: 4, 1>}, {transform_indices = @transform_2, window_bounds = array<i64: 32, 512>}, {transform_indices = @transform_3, window_bounds = array<i64: 4, 512>}]} {
    %c0 = arith.constant 0 : index
    %c0_0 = arith.constant 0 : index
    %0 = vector.load %arg1[%c0, %c0_0] : memref<4x32xbf16, #tpu.memory_space<vmem>>, vector<4x32xbf16>
    %c0_1 = arith.constant 0 : index
    %c0_2 = arith.constant 0 : index
    %1 = vector.load %arg3[%c0_1, %c0_2] : memref<32x512xbf16, #tpu.memory_space<vmem>>, vector<32x512xbf16>
    %cst = arith.constant dense<0.000000e+00> : vector<4x512xf32>
    %2 = tpu.matmul %0, %1, %cst {dimension_numbers = #tpu.dot_dimension_numbers<[1], [0], [0], [1], [0, 0, 1, 1], [], []>} : vector<4x32xbf16>, vector<32x512xbf16>, vector<4x512xf32> -> vector<4x512xf32>
    %c0_3 = arith.constant 0 : index
    %c0_4 = arith.constant 0 : index
    %3 = vector.load %arg2[%c0_3, %c0_4] : memref<4x1xf32, #tpu.memory_space<vmem>>, vector<4x1xf32>
    %4 = vector.broadcast %3 : vector<4x1xf32> to vector<4x512xf32>
    %5 = arith.addf %2, %4 : vector<4x512xf32>
    %c0_5 = arith.constant 0 : index
    %c0_6 = arith.constant 0 : index
    %6 = vector.load %arg4[%c0_5, %c0_6] : memref<4x512xf32, #tpu.memory_space<vmem>>, vector<4x512xf32>
    tpu.vector_store %arg4[%c0_5, %c0_6], %5 {strides = array<i32>} : memref<4x512xf32, #tpu.memory_space<vmem>>, vector<4x512xf32>,
    return
  }
  func.func @transform_0(%arg0: i32) -> (i32, i32) {
    %c0_i32 = arith.constant 0 : i32
    %c0_i32_0 = arith.constant 0 : i32
    %c0_i32_1 = arith.constant 0 : i32
    return %c0_i32, %c0_i32_0 : i32, i32
  }
  func.func @transform_1(%arg0: i32) -> (i32, i32) {
    %c0_i32 = arith.constant 0 : i32
    %c0_i32_0 = arith.constant 0 : i32
    %c0_i32_1 = arith.constant 0 : i32
    return %c0_i32, %c0_i32_0 : i32, i32
  }
  func.func @transform_2(%arg0: i32) -> (i32, i32) {
    %c0_i32 = arith.constant 0 : i32
    %c0_i32_0 = arith.constant 0 : i32
    return %c0_i32, %arg0 : i32, i32
  }
  func.func @transform_3(%arg0: i32) -> (i32, i32) {
    %c0_i32 = arith.constant 0 : i32
    %c0_i32_0 = arith.constant 0 : i32
    return %c0_i32, %arg0 : i32, i32
  }
}

</mosaic_0001>

<llo_original>
// kernel: hourglass_forward.20
$region0: #{hourglass_forward.20}
  #allocation0 [shape = 'u32[]', space=smem, size = 0x4, offset = 0x4, fixed_abs, tag = 'smem constant byte address 0x4 - core index']
  #allocation1 [shape = 'u32[72,128]{1,0:T(1,128)}', space=vmem, size = 0x9000, scoped, tag = 'internal scratch']
  %s0 = inlined_call_operand.vmem [shape: bf16[8,108], index: 0, kind: input, shape index: {}]
  %s1 = inlined_call_operand.vmem [shape: f32[8,1], index: 1, kind: input, shape index: {}]
  %s2 = inlined_call_operand.vmem [shape: bf16[108,512], index: 2, kind: input, shape index: {}]
  %s3 = inlined_call_operand.vmem [shape: f32[8,512], index: 3, kind: output, shape index: {}]
  %s4 = sld [smem:[#allocation0]]
  $region22: #{hourglass_forward.20} parent=0
    _
  %s6 = ssub.s32 1, %s4
  %s7 = scalar_select 0, %s6, %s4
  // Predicated region
  $region2: #{hourglass_forward.20} parent=0 // pred_check
    _
  $region3: #{hourglass_forward.20} parent=0 // pred_check_branch
    %9 = sbr.rel (0) target = $region5
  $region4: #{hourglass_forward.20} parent=0 // pred_region
    _
  $region5: #{hourglass_forward.20} parent=0 // pred_fallthru
    _
  // Predicated region
  $region6: #{hourglass_forward.20} parent=0 // pred_check
    _
  $region7: #{hourglass_forward.20} parent=0 // pred_check_branch
    %11 = sbr.rel (0) target = $region9
  $region8: #{hourglass_forward.20} parent=0 // pred_region
    _
  $region9: #{hourglass_forward.20} parent=0 // pred_fallthru
    _
  // Predicated region
  $region10: #{hourglass_forward.20} parent=0 // pred_check
    _
  $region11: #{hourglass_forward.20} parent=0 // pred_check_branch
    %13 = sbr.rel (0) target = $region13
  $region12: #{hourglass_forward.20} parent=0 // pred_region
    _
  $region13: #{hourglass_forward.20} parent=0 // pred_fallthru
    _
  %v15 = vld [vmem:[%s0] sm:$0xf]
  %v16 = vld [vmem:[%s2] sm:$0xff]
  %v17 = vld [vmem:[%s2 + $0x8] sm:$0xff]
  %v18 = vld [vmem:[%s2 + $0x10] sm:$0xff]
  %v19 = vld [vmem:[%s2 + $0x18] sm:$0xff]
  %v20 = vld [vmem:[%s2 + $0x20] sm:$0xff]
  %v21 = vld [vmem:[%s2 + $0x28] sm:$0xff]
  %v22 = vld [vmem:[%s2 + $0x30] sm:$0xff]
  %v23 = vld [vmem:[%s2 + $0x38] sm:$0xff]
  %v24 = vld [vmem:[%s2 + $0x40] sm:$0xff]
  %v25 = vld [vmem:[%s2 + $0x48] sm:$0xff]
  %v26 = vld [vmem:[%s2 + $0x50] sm:$0xff]
  %v27 = vld [vmem:[%s2 + $0x58] sm:$0xff]
  %v28 = vld [vmem:[%s2 + $0x60] sm:$0xff]
  %v29 = vld [vmem:[%s2 + $0x68] sm:$0xff]
  %v30 = vld [vmem:[%s2 + $0x70] sm:$0xff]
  %v31 = vld [vmem:[%s2 + $0x78] sm:$0xff]
  %v32 = vld [vmem:[%s2 + $0x80] sm:$0xff]
  %v33 = vld [vmem:[%s2 + $0x88] sm:$0xff]
  %v34 = vld [vmem:[%s2 + $0x90] sm:$0xff]
  %v35 = vld [vmem:[%s2 + $0x98] sm:$0xff]
  %v36 = vld [vmem:[%s2 + $0xa0] sm:$0xff]
  %v37 = vld [vmem:[%s2 + $0xa8] sm:$0xff]
  %v38 = vld [vmem:[%s2 + $0xb0] sm:$0xff]
  %v39 = vld [vmem:[%s2 + $0xb8] sm:$0xff]
  %v40 = vld [vmem:[%s2 + $0xc0] sm:$0xff]
  %v41 = vld [vmem:[%s2 + $0xc8] sm:$0xff]
  %v42 = vld [vmem:[%s2 + $0xd0] sm:$0x33]
  %v43 = vld [vmem:[%s2 + $0xd8] sm:$0x33]
  %v44 = vld [vmem:[%s1] sm:$0xff]
  %46 = vset.pattern.permute.xlu0 0
  %47 = vperm.xlu0 %46, %v44
  %v48 = vpop.permute.xlu0 %47
  %v78 = vunpack.c.l.b16 %v16
  %v79 = vunpack.c.h.b16 %v16
  %v80 = vunpack.c.l.b16 %v17
  %v81 = vunpack.c.h.b16 %v17
  %v82 = vunpack.c.l.b16 %v18
  %v83 = vunpack.c.h.b16 %v18
  %v84 = vunpack.c.l.b16 %v19
  %v85 = vunpack.c.h.b16 %v19
  %v86 = vunpack.c.l.b16 %v20
  %v87 = vunpack.c.h.b16 %v20
  %v88 = vunpack.c.l.b16 %v21
  %v89 = vunpack.c.h.b16 %v21
  %v90 = vunpack.c.l.b16 %v22
  %v91 = vunpack.c.h.b16 %v22
  %v92 = vunpack.c.l.b16 %v23
  %v93 = vunpack.c.h.b16 %v23
  %v94 = vunpack.c.l.b16 %v24
  %v95 = vunpack.c.h.b16 %v24
  %v96 = vunpack.c.l.b16 %v25
  %v97 = vunpack.c.h.b16 %v25
  %v98 = vunpack.c.l.b16 %v26
  %v99 = vunpack.c.h.b16 %v26
  %v100 = vunpack.c.l.b16 %v27
  %v101 = vunpack.c.h.b16 %v27
  %v102 = vunpack.c.l.b16 %v28
  %v103 = vunpack.c.h.b16 %v28
  %v104 = vunpack.c.l.b16 %v29
  %v105 = vunpack.c.h.b16 %v29
  %v106 = vunpack.c.l.b16 %v30
  %v107 = vunpack.c.h.b16 %v30
  %v108 = vunpack.c.l.b16 %v31
  %v109 = vunpack.c.h.b16 %v31
  %v110 = vunpack.c.l.b16 %v32
  %v111 = vunpack.c.h.b16 %v32
  %v112 = vunpack.c.l.b16 %v33
  %v113 = vunpack.c.h.b16 %v33
  %v114 = vunpack.c.l.b16 %v34
  %v115 = vunpack.c.h.b16 %v34
  %v116 = vunpack.c.l.b16 %v35
  %v117 = vunpack.c.h.b16 %v35
  %v118 = vunpack.c.l.b16 %v36
  %v119 = vunpack.c.h.b16 %v36
  %v120 = vunpack.c.l.b16 %v37
  %v121 = vunpack.c.h.b16 %v37
  %v122 = vunpack.c.l.b16 %v38
  %v123 = vunpack.c.h.b16 %v38
  %v124 = vunpack.c.l.b16 %v39
  %v125 = vunpack.c.h.b16 %v39
  %v126 = vunpack.c.l.b16 %v40
  %v127 = vunpack.c.h.b16 %v40
  %v128 = vunpack.c.l.b16 %v41
  %v129 = vunpack.c.h.b16 %v41
  %v130 = vunpack.c.l.b16 %v42
  %v131 = vunpack.c.h.b16 %v42
  %v132 = vunpack.c.l.b16 %v43
  %v133 = vunpack.c.h.b16 %v43
  %v134 = vpack.c.b16 %v82, %v78
  %v135 = vpack.c.b16 %v83, %v79
  %v136 = vpack.c.b16 %v84, %v80
  %v137 = vpack.c.b16 %v85, %v81
  %v138 = vpack.c.b16 %v90, %v86
  %v139 = vpack.c.b16 %v91, %v87
  %v140 = vpack.c.b16 %v92, %v88
  %v141 = vpack.c.b16 %v93, %v89
  %v142 = vpack.c.b16 %v98, %v94
  %v143 = vpack.c.b16 %v99, %v95
  %v144 = vpack.c.b16 %v100, %v96
  %v145 = vpack.c.b16 %v101, %v97
  %v146 = vpack.c.b16 %v106, %v102
  %v147 = vpack.c.b16 %v107, %v103
  %v148 = vpack.c.b16 %v108, %v104
  %v149 = vpack.c.b16 %v109, %v105
  %v150 = vpack.c.b16 %v114, %v110
  %v151 = vpack.c.b16 %v115, %v111
  %v152 = vpack.c.b16 %v116, %v112
  %v153 = vpack.c.b16 %v117, %v113
  %v154 = vpack.c.b16 %v122, %v118
  %v155 = vpack.c.b16 %v123, %v119
  %v156 = vpack.c.b16 %v124, %v120
  %v157 = vpack.c.b16 %v125, %v121
  %v158 = vpack.c.b16 %v130, %v126
  %v159 = vpack.c.b16 %v131, %v127
  %v160 = vpack.c.b16 %v132, %v128
  %v161 = vpack.c.b16 %v133, %v129
  %vm186 = vcmask 883712
  %v188 = vsel %vm186, %v15, 0
  %vm190 = vcmask 1045504
  %v192 = vsel %vm190, %v158, 0
  %v195 = vsel %vm190, %v159, 0
  %v198 = vsel %vm190, %v160, 0
  %v201 = vsel %vm190, %v161, 0
  %203 = vmatpush.bf16.msra.mxu0 0
  %204 = vmatpush.bf16.msra.mxu0 %v192
  %205 = vmatpush.bf16.msra.mxu0 %v154
  %206 = vmatpush.bf16.msra.mxu0 %v150
  %207 = vmatpush.bf16.msra.mxu0 %v146
  %208 = vmatpush.bf16.msra.mxu0 %v142
  %209 = vmatpush.bf16.msra.mxu0 %v138
  %210 = vmatpush.bf16.msra.mxu0 %v134
  %211 = vmatmul.bf16.gmra.mxu0 %v188
  %v212 = vpop.f32.mrf.mxu0
  %v213 = vadd.f32 %v48, %v212
  %v214 = vpop.f32.mrf.mxu0
  %215 = vdwg.mxu0
  %216 = vmatpush.bf16.msra.mxu0 0
  %217 = vmatpush.bf16.msra.mxu0 %v195
  %218 = vmatpush.bf16.msra.mxu0 %v155
  %219 = vmatpush.bf16.msra.mxu0 %v151
  %220 = vmatpush.bf16.msra.mxu0 %v147
  %221 = vmatpush.bf16.msra.mxu0 %v143
  %222 = vmatpush.bf16.msra.mxu0 %v139
  %223 = vmatpush.bf16.msra.mxu0 %v135
  %224 = vmatmul.bf16.gmra.mxu0 %v188
  %v225 = vpop.f32.mrf.mxu0
  %v226 = vadd.f32 %v48, %v225
  %v227 = vpop.f32.mrf.mxu0
  %228 = vdwg.mxu0
  %229 = vmatpush.bf16.msra.mxu0 0
  %230 = vmatpush.bf16.msra.mxu0 %v198
  %231 = vmatpush.bf16.msra.mxu0 %v156
  %232 = vmatpush.bf16.msra.mxu0 %v152
  %233 = vmatpush.bf16.msra.mxu0 %v148
  %234 = vmatpush.bf16.msra.mxu0 %v144
  %235 = vmatpush.bf16.msra.mxu0 %v140
  %236 = vmatpush.bf16.msra.mxu0 %v136
  %237 = vmatmul.bf16.gmra.mxu0 %v188
  %v238 = vpop.f32.mrf.mxu0
  %v239 = vadd.f32 %v48, %v238
  %v240 = vpop.f32.mrf.mxu0
  %241 = vdwg.mxu0
  %242 = vmatpush.bf16.msra.mxu0 0
  %243 = vmatpush.bf16.msra.mxu0 %v201
  %244 = vmatpush.bf16.msra.mxu0 %v157
  %245 = vmatpush.bf16.msra.mxu0 %v153
  %246 = vmatpush.bf16.msra.mxu0 %v149
  %247 = vmatpush.bf16.msra.mxu0 %v145
  %248 = vmatpush.bf16.msra.mxu0 %v141
  %249 = vmatpush.bf16.msra.mxu0 %v137
  %250 = vmatmul.bf16.gmra.mxu0 %v188
  %v251 = vpop.f32.mrf.mxu0
  %v252 = vadd.f32 %v48, %v251
  %v253 = vpop.f32.mrf.mxu0
  %254 = vdwg.mxu0
  %v255 = vmax.f32 %v213, 0.0
  %v256 = vmax.f32 %v226, 0.0
  %v257 = vmax.f32 %v239, 0.0
  %v258 = vmax.f32 %v252, 0.0
  %259 = vst [vmem:[%s3] sm:$0xff] %v255
  %260 = vst [vmem:[%s3 + $0x8] sm:$0xff] %v256
  %261 = vst [vmem:[%s3 + $0x10] sm:$0xff] %v257
  %262 = vst [vmem:[%s3 + $0x18] sm:$0xff] %v258
  // Predicated region
  $region14: #{hourglass_forward.20} parent=0 // pred_check
    _
  $region15: #{hourglass_forward.20} parent=0 // pred_check_branch
    %264 = sbr.rel (0) target = $region17
  $region16: #{hourglass_forward.20} parent=0 // pred_region
    _
  $region17: #{hourglass_forward.20} parent=0 // pred_fallthru
    _
  // Predicated region
  $region18: #{hourglass_forward.20} parent=0 // pred_check
    _
  $region19: #{hourglass_forward.20} parent=0 // pred_check_branch
    %266 = sbr.rel (0) target = $region21
  $region20: #{hourglass_forward.20} parent=0 // pred_region
    _
  $region21: #{hourglass_forward.20} parent=0 // pred_fallthru
    _

// kernel: hourglass_forward.21
$region0: #{hourglass_forward.21}
  #allocation0 [shape = 'u32[]', space=smem, size = 0x4, offset = 0x4, fixed_abs, tag = 'smem constant byte address 0x4 - core index']
  #allocation1 [shape = 'u32[72,128]{1,0:T(1,128)}', space=vmem, size = 0x9000, scoped, tag = 'internal scratch']
  %s0 = inlined_call_operand.vmem [shape: bf16[8,216], index: 0, kind: input, shape index: {}]
  %s1 = inlined_call_operand.vmem [shape: f32[8,1], index: 1, kind: input, shape index: {}]
  %s2 = inlined_call_operand.vmem [shape: bf16[216,512], index: 2, kind: input, shape index: {}]
  %s3 = inlined_call_operand.vmem [shape: f32[8,512], index: 3, kind: output, shape index: {}]
  %s4 = sld [smem:[#allocation0]]
  $region22: #{hourglass_forward.21} parent=0
    _
  %s6 = ssub.s32 1, %s4
  %s7 = scalar_select 0, %s6, %s4
  // Predicated region
  $region2: #{hourglass_forward.21} parent=0 // pred_check
    _
  $region3: #{hourglass_forward.21} parent=0 // pred_check_branch
    %9 = sbr.rel (0) target = $region5
  $region4: #{hourglass_forward.21} parent=0 // pred_region
    _
  $region5: #{hourglass_forward.21} parent=0 // pred_fallthru
    _
  // Predicated region
  $region6: #{hourglass_forward.21} parent=0 // pred_check
    _
  $region7: #{hourglass_forward.21} parent=0 // pred_check_branch
    %11 = sbr.rel (0) target = $region9
  $region8: #{hourglass_forward.21} parent=0 // pred_region
    _
  $region9: #{hourglass_forward.21} parent=0 // pred_fallthru
    _
  // Predicated region
  $region10: #{hourglass_forward.21} parent=0 // pred_check
    _
  $region11: #{hourglass_forward.21} parent=0 // pred_check_branch
    %13 = sbr.rel (0) target = $region13
  $region12: #{hourglass_forward.21} parent=0 // pred_region
    _
  $region13: #{hourglass_forward.21} parent=0 // pred_fallthru
    _
  %v15 = vld [vmem:[%s0] sm:$0xff]
  %v16 = vld [vmem:[%s2] sm:$0xff]
  %v17 = vld [vmem:[%s2 + $0x8] sm:$0xff]
  %v18 = vld [vmem:[%s2 + $0x10] sm:$0xff]
  %v19 = vld [vmem:[%s2 + $0x18] sm:$0xff]
  %v20 = vld [vmem:[%s2 + $0x20] sm:$0xff]
  %v21 = vld [vmem:[%s2 + $0x28] sm:$0xff]
  %v22 = vld [vmem:[%s2 + $0x30] sm:$0xff]
  %v23 = vld [vmem:[%s2 + $0x38] sm:$0xff]
  %v24 = vld [vmem:[%s2 + $0x40] sm:$0xff]
  %v25 = vld [vmem:[%s2 + $0x48] sm:$0xff]
  %v26 = vld [vmem:[%s2 + $0x50] sm:$0xff]
  %v27 = vld [vmem:[%s2 + $0x58] sm:$0xff]
  %v28 = vld [vmem:[%s2 + $0x60] sm:$0xff]
  %v29 = vld [vmem:[%s2 + $0x68] sm:$0xff]
  %v30 = vld [vmem:[%s2 + $0x70] sm:$0xff]
  %v31 = vld [vmem:[%s2 + $0x78] sm:$0xff]
  %v32 = vld [vmem:[%s2 + $0x80] sm:$0xff]
  %v33 = vld [vmem:[%s2 + $0x88] sm:$0xff]
  %v34 = vld [vmem:[%s2 + $0x90] sm:$0xff]
  %v35 = vld [vmem:[%s2 + $0x98] sm:$0xff]
  %v36 = vld [vmem:[%s2 + $0xa0] sm:$0xff]
  %v37 = vld [vmem:[%s2 + $0xa8] sm:$0xff]
  %v38 = vld [vmem:[%s2 + $0xb0] sm:$0xff]
  %v39 = vld [vmem:[%s2 + $0xb8] sm:$0xff]
  %v40 = vld [vmem:[%s2 + $0xc0] sm:$0xff]
  %v41 = vld [vmem:[%s2 + $0xc8] sm:$0xff]
  %v42 = vld [vmem:[%s2 + $0xd0] sm:$0xff]
  %v43 = vld [vmem:[%s2 + $0xd8] sm:$0xff]
  %v44 = vld [vmem:[%s2 + $0xe0] sm:$0xff]
  %v45 = vld [vmem:[%s2 + $0xe8] sm:$0xff]
  %v46 = vld [vmem:[%s2 + $0xf0] sm:$0xff]
  %v47 = vld [vmem:[%s2 + $0xf8] sm:$0xff]
  %v48 = vld [vmem:[%s2 + $0x100] sm:$0xff]
  %v49 = vld [vmem:[%s2 + $0x108] sm:$0xff]
  %v50 = vld [vmem:[%s2 + $0x110] sm:$0xff]
  %v51 = vld [vmem:[%s2 + $0x118] sm:$0xff]
  %v52 = vld [vmem:[%s2 + $0x120] sm:$0xff]
  %v53 = vld [vmem:[%s2 + $0x128] sm:$0xff]
  %v54 = vld [vmem:[%s2 + $0x130] sm:$0xff]
  %v55 = vld [vmem:[%s2 + $0x138] sm:$0xff]
  %v56 = vld [vmem:[%s2 + $0x140] sm:$0xff]
  %v57 = vld [vmem:[%s2 + $0x148] sm:$0xff]
  %v58 = vld [vmem:[%s2 + $0x150] sm:$0xff]
  %v59 = vld [vmem:[%s2 + $0x158] sm:$0xff]
  %v60 = vld [vmem:[%s2 + $0x160] sm:$0xff]
  %v61 = vld [vmem:[%s2 + $0x168] sm:$0xff]
  %v62 = vld [vmem:[%s2 + $0x170] sm:$0xff]
  %v63 = vld [vmem:[%s2 + $0x178] sm:$0xff]
  %v64 = vld [vmem:[%s2 + $0x180] sm:$0xff]
  %v65 = vld [vmem:[%s2 + $0x188] sm:$0xff]
  %v66 = vld [vmem:[%s2 + $0x190] sm:$0xff]
  %v67 = vld [vmem:[%s2 + $0x198] sm:$0xff]
  %v68 = vld [vmem:[%s2 + $0x1a0] sm:$0xff]
  %v69 = vld [vmem:[%s2 + $0x1a8] sm:$0xff]
  %v70 = vld [vmem:[%s1] sm:$0xff]
  %72 = vset.pattern.permute.xlu0 0
  %73 = vperm.xlu0 %72, %v70
  %v74 = vpop.permute.xlu0 %73
  %v77 = vunpack.c.l.b16 %v15
  %v78 = vunpack.c.h.b16 %v15
  %v79 = vpack.c.b16 %v77, %v77
  %v80 = vpack.c.b16 %v78, %v78
  %v136 = vunpack.c.l.b16 %v16
  %v137 = vunpack.c.h.b16 %v16
  %v138 = vunpack.c.l.b16 %v17
  %v139 = vunpack.c.h.b16 %v17
  %v140 = vunpack.c.l.b16 %v18
  %v141 = vunpack.c.h.b16 %v18
  %v142 = vunpack.c.l.b16 %v19
  %v143 = vunpack.c.h.b16 %v19
  %v144 = vunpack.c.l.b16 %v20
  %v145 = vunpack.c.h.b16 %v20
  %v146 = vunpack.c.l.b16 %v21
  %v147 = vunpack.c.h.b16 %v21
  %v148 = vunpack.c.l.b16 %v22
  %v149 = vunpack.c.h.b16 %v22
  %v150 = vunpack.c.l.b16 %v23
  %v151 = vunpack.c.h.b16 %v23
  %v152 = vunpack.c.l.b16 %v24
  %v153 = vunpack.c.h.b16 %v24
  %v154 = vunpack.c.l.b16 %v25
  %v155 = vunpack.c.h.b16 %v25
  %v156 = vunpack.c.l.b16 %v26
  %v157 = vunpack.c.h.b16 %v26
  %v158 = vunpack.c.l.b16 %v27
  %v159 = vunpack.c.h.b16 %v27
  %v160 = vunpack.c.l.b16 %v28
  %v161 = vunpack.c.h.b16 %v28
  %v162 = vunpack.c.l.b16 %v29
  %v163 = vunpack.c.h.b16 %v29
  %v164 = vunpack.c.l.b16 %v30
  %v165 = vunpack.c.h.b16 %v30
  %v166 = vunpack.c.l.b16 %v31
  %v167 = vunpack.c.h.b16 %v31
  %v168 = vunpack.c.l.b16 %v32
  %v169 = vunpack.c.h.b16 %v32
  %v170 = vunpack.c.l.b16 %v33
  %v171 = vunpack.c.h.b16 %v33
  %v172 = vunpack.c.l.b16 %v34
  %v173 = vunpack.c.h.b16 %v34
  %v174 = vunpack.c.l.b16 %v35
  %v175 = vunpack.c.h.b16 %v35
  %v176 = vunpack.c.l.b16 %v36
  %v177 = vunpack.c.h.b16 %v36
  %v178 = vunpack.c.l.b16 %v37
  %v179 = vunpack.c.h.b16 %v37
  %v180 = vunpack.c.l.b16 %v38
  %v181 = vunpack.c.h.b16 %v38
  %v182 = vunpack.c.l.b16 %v39
  %v183 = vunpack.c.h.b16 %v39
  %v184 = vunpack.c.l.b16 %v40
  %v185 = vunpack.c.h.b16 %v40
  %v186 = vunpack.c.l.b16 %v41
  %v187 = vunpack.c.h.b16 %v41
  %v188 = vunpack.c.l.b16 %v42
  %v189 = vunpack.c.h.b16 %v42
  %v190 = vunpack.c.l.b16 %v43
  %v191 = vunpack.c.h.b16 %v43
  %v192 = vunpack.c.l.b16 %v44
  %v193 = vunpack.c.h.b16 %v44
  %v194 = vunpack.c.l.b16 %v45
  %v195 = vunpack.c.h.b16 %v45
  %v196 = vunpack.c.l.b16 %v46
  %v197 = vunpack.c.h.b16 %v46
  %v198 = vunpack.c.l.b16 %v47
  %v199 = vunpack.c.h.b16 %v47
  %v200 = vunpack.c.l.b16 %v48
  %v201 = vunpack.c.h.b16 %v48
  %v202 = vunpack.c.l.b16 %v49
  %v203 = vunpack.c.h.b16 %v49
  %v204 = vunpack.c.l.b16 %v50
  %v205 = vunpack.c.h.b16 %v50
  %v206 = vunpack.c.l.b16 %v51
  %v207 = vunpack.c.h.b16 %v51
  %v208 = vunpack.c.l.b16 %v52
  %v209 = vunpack.c.h.b16 %v52
  %v210 = vunpack.c.l.b16 %v53
  %v211 = vunpack.c.h.b16 %v53
  %v212 = vunpack.c.l.b16 %v54
  %v213 = vunpack.c.h.b16 %v54
  %v214 = vunpack.c.l.b16 %v55
  %v215 = vunpack.c.h.b16 %v55
  %v216 = vunpack.c.l.b16 %v56
  %v217 = vunpack.c.h.b16 %v56
  %v218 = vunpack.c.l.b16 %v57
  %v219 = vunpack.c.h.b16 %v57
  %v220 = vunpack.c.l.b16 %v58
  %v221 = vunpack.c.h.b16 %v58
  %v222 = vunpack.c.l.b16 %v59
  %v223 = vunpack.c.h.b16 %v59
  %v224 = vunpack.c.l.b16 %v60
  %v225 = vunpack.c.h.b16 %v60
  %v226 = vunpack.c.l.b16 %v61
  %v227 = vunpack.c.h.b16 %v61
  %v228 = vunpack.c.l.b16 %v62
  %v229 = vunpack.c.h.b16 %v62
  %v230 = vunpack.c.l.b16 %v63
  %v231 = vunpack.c.h.b16 %v63
  %v232 = vunpack.c.l.b16 %v64
  %v233 = vunpack.c.h.b16 %v64
  %v234 = vunpack.c.l.b16 %v65
  %v235 = vunpack.c.h.b16 %v65
  %v236 = vunpack.c.l.b16 %v66
  %v237 = vunpack.c.h.b16 %v66
  %v238 = vunpack.c.l.b16 %v67
  %v239 = vunpack.c.h.b16 %v67
  %v240 = vunpack.c.l.b16 %v68
  %v241 = vunpack.c.h.b16 %v68
  %v242 = vunpack.c.l.b16 %v69
  %v243 = vunpack.c.h.b16 %v69
  %v244 = vpack.c.b16 %v140, %v136
  %v245 = vpack.c.b16 %v141, %v137
  %v246 = vpack.c.b16 %v142, %v138
  %v247 = vpack.c.b16 %v143, %v139
  %v248 = vpack.c.b16 %v148, %v144
  %v249 = vpack.c.b16 %v149, %v145
  %v250 = vpack.c.b16 %v150, %v146
  %v251 = vpack.c.b16 %v151, %v147
  %v252 = vpack.c.b16 %v156, %v152
  %v253 = vpack.c.b16 %v157, %v153
  %v254 = vpack.c.b16 %v158, %v154
  %v255 = vpack.c.b16 %v159, %v155
  %v256 = vpack.c.b16 %v164, %v160
  %v257 = vpack.c.b16 %v165, %v161
  %v258 = vpack.c.b16 %v166, %v162
  %v259 = vpack.c.b16 %v167, %v163
  %v260 = vpack.c.b16 %v172, %v168
  %v261 = vpack.c.b16 %v173, %v169
  %v262 = vpack.c.b16 %v174, %v170
  %v263 = vpack.c.b16 %v175, %v171
  %v264 = vpack.c.b16 %v180, %v176
  %v265 = vpack.c.b16 %v181, %v177
  %v266 = vpack.c.b16 %v182, %v178
  %v267 = vpack.c.b16 %v183, %v179
  %v268 = vpack.c.b16 %v188, %v184
  %v269 = vpack.c.b16 %v189, %v185
  %v270 = vpack.c.b16 %v190, %v186
  %v271 = vpack.c.b16 %v191, %v187
  %v272 = vpack.c.b16 %v196, %v192
  %v273 = vpack.c.b16 %v197, %v193
  %v274 = vpack.c.b16 %v198, %v194
  %v275 = vpack.c.b16 %v199, %v195
  %v276 = vpack.c.b16 %v204, %v200
  %v277 = vpack.c.b16 %v205, %v201
  %v278 = vpack.c.b16 %v206, %v202
  %v279 = vpack.c.b16 %v207, %v203
  %v280 = vpack.c.b16 %v212, %v208
  %v281 = vpack.c.b16 %v213, %v209
  %v282 = vpack.c.b16 %v214, %v210
  %v283 = vpack.c.b16 %v215, %v211
  %v284 = vpack.c.b16 %v220, %v216
  %v285 = vpack.c.b16 %v221, %v217
  %v286 = vpack.c.b16 %v222, %v218
  %v287 = vpack.c.b16 %v223, %v219
  %v288 = vpack.c.b16 %v228, %v224
  %v289 = vpack.c.b16 %v229, %v225
  %v290 = vpack.c.b16 %v230, %v226
  %v291 = vpack.c.b16 %v231, %v227
  %v292 = vpack.c.b16 %v236, %v232
  %v293 = vpack.c.b16 %v237, %v233
  %v294 = vpack.c.b16 %v238, %v234
  %v295 = vpack.c.b16 %v239, %v235
  %v296 = vpack.c.b16 %v240, %v240
  %v297 = vpack.c.b16 %v241, %v241
  %v298 = vpack.c.b16 %v242, %v242
  %v299 = vpack.c.b16 %v243, %v243
  %vm352 = vcmask 719872
  %v354 = vsel %vm352, %v80, 0
  %vm356 = vcmask 1043456
  %v358 = vsel %vm356, %v296, 0
  %v361 = vsel %vm356, %v297, 0
  %v364 = vsel %vm356, %v298, 0
  %v367 = vsel %vm356, %v299, 0
  %369 = vmatpush.bf16.msra.mxu0 %v272
  %370 = vmatpush.bf16.msra.mxu0 %v268
  %371 = vmatpush.bf16.msra.mxu0 %v264
  %372 = vmatpush.bf16.msra.mxu0 %v260
  %373 = vmatpush.bf16.msra.mxu0 %v256
  %374 = vmatpush.bf16.msra.mxu0 %v252
  %375 = vmatpush.bf16.msra.mxu0 %v248
  %376 = vmatpush.bf16.msra.mxu0 %v244
  %377 = vmatmul.bf16.gmra.mxu0 %v79
  %v378 = vpop.f32.mrf.mxu0
  %v379 = vadd.f32 %v74, %v378
  %v380 = vpop.f32.mrf.mxu0
  %381 = vdwg.mxu0
  %382 = vmatpush.bf16.msra.mxu0 0
  %383 = vmatpush.bf16.msra.mxu0 0
  %384 = vmatpush.bf16.msra.mxu0 %v358
  %385 = vmatpush.bf16.msra.mxu0 %v292
  %386 = vmatpush.bf16.msra.mxu0 %v288
  %387 = vmatpush.bf16.msra.mxu0 %v284
  %388 = vmatpush.bf16.msra.mxu0 %v280
  %389 = vmatpush.bf16.msra.mxu0 %v276
  %390 = vmatmul.bf16.gmra.mxu0 %v354
  %v391 = vpop.f32.mrf.mxu0
  %v392 = vadd.f32 %v379, %v391
  %v393 = vpop.f32.mrf.mxu0
  %394 = vdwg.mxu0
  %395 = vmatpush.bf16.msra.mxu0 %v273
  %396 = vmatpush.bf16.msra.mxu0 %v269
  %397 = vmatpush.bf16.msra.mxu0 %v265
  %398 = vmatpush.bf16.msra.mxu0 %v261
  %399 = vmatpush.bf16.msra.mxu0 %v257
  %400 = vmatpush.bf16.msra.mxu0 %v253
  %401 = vmatpush.bf16.msra.mxu0 %v249
  %402 = vmatpush.bf16.msra.mxu0 %v245
  %403 = vmatmul.bf16.gmra.mxu0 %v79
  %v404 = vpop.f32.mrf.mxu0
  %v405 = vadd.f32 %v74, %v404
  %v406 = vpop.f32.mrf.mxu0
  %407 = vdwg.mxu0
  %408 = vmatpush.bf16.msra.mxu0 0
  %409 = vmatpush.bf16.msra.mxu0 0
  %410 = vmatpush.bf16.msra.mxu0 %v361
  %411 = vmatpush.bf16.msra.mxu0 %v293
  %412 = vmatpush.bf16.msra.mxu0 %v289
  %413 = vmatpush.bf16.msra.mxu0 %v285
  %414 = vmatpush.bf16.msra.mxu0 %v281
  %415 = vmatpush.bf16.msra.mxu0 %v277
  %416 = vmatmul.bf16.gmra.mxu0 %v354
  %v417 = vpop.f32.mrf.mxu0
  %v418 = vadd.f32 %v405, %v417
  %v419 = vpop.f32.mrf.mxu0
  %420 = vdwg.mxu0
  %421 = vmatpush.bf16.msra.mxu0 %v274
  %422 = vmatpush.bf16.msra.mxu0 %v270
  %423 = vmatpush.bf16.msra.mxu0 %v266
  %424 = vmatpush.bf16.msra.mxu0 %v262
  %425 = vmatpush.bf16.msra.mxu0 %v258
  %426 = vmatpush.bf16.msra.mxu0 %v254
  %427 = vmatpush.bf16.msra.mxu0 %v250
  %428 = vmatpush.bf16.msra.mxu0 %v246
  %429 = vmatmul.bf16.gmra.mxu0 %v79
  %v430 = vpop.f32.mrf.mxu0
  %v431 = vadd.f32 %v74, %v430
  %v432 = vpop.f32.mrf.mxu0
  %433 = vdwg.mxu0
  %434 = vmatpush.bf16.msra.mxu0 0
  %435 = vmatpush.bf16.msra.mxu0 0
  %436 = vmatpush.bf16.msra.mxu0 %v364
  %437 = vmatpush.bf16.msra.mxu0 %v294
  %438 = vmatpush.bf16.msra.mxu0 %v290
  %439 = vmatpush.bf16.msra.mxu0 %v286
  %440 = vmatpush.bf16.msra.mxu0 %v282
  %441 = vmatpush.bf16.msra.mxu0 %v278
  %442 = vmatmul.bf16.gmra.mxu0 %v354
  %v443 = vpop.f32.mrf.mxu0
  %v444 = vadd.f32 %v431, %v443
  %v445 = vpop.f32.mrf.mxu0
  %446 = vdwg.mxu0
  %447 = vmatpush.bf16.msra.mxu0 %v275
  %448 = vmatpush.bf16.msra.mxu0 %v271
  %449 = vmatpush.bf16.msra.mxu0 %v267
  %450 = vmatpush.bf16.msra.mxu0 %v263
  %451 = vmatpush.bf16.msra.mxu0 %v259
  %452 = vmatpush.bf16.msra.mxu0 %v255
  %453 = vmatpush.bf16.msra.mxu0 %v251
  %454 = vmatpush.bf16.msra.mxu0 %v247
  %455 = vmatmul.bf16.gmra.mxu0 %v79
  %v456 = vpop.f32.mrf.mxu0
  %v457 = vadd.f32 %v74, %v456
  %v458 = vpop.f32.mrf.mxu0
  %459 = vdwg.mxu0
  %460 = vmatpush.bf16.msra.mxu0 0
  %461 = vmatpush.bf16.msra.mxu0 0
  %462 = vmatpush.bf16.msra.mxu0 %v367
  %463 = vmatpush.bf16.msra.mxu0 %v295
  %464 = vmatpush.bf16.msra.mxu0 %v291
  %465 = vmatpush.bf16.msra.mxu0 %v287
  %466 = vmatpush.bf16.msra.mxu0 %v283
  %467 = vmatpush.bf16.msra.mxu0 %v279
  %468 = vmatmul.bf16.gmra.mxu0 %v354
  %v469 = vpop.f32.mrf.mxu0
  %v470 = vadd.f32 %v457, %v469
  %v471 = vpop.f32.mrf.mxu0
  %472 = vdwg.mxu0
  %v473 = vmax.f32 %v392, 0.0
  %v474 = vmax.f32 %v418, 0.0
  %v475 = vmax.f32 %v444, 0.0
  %v476 = vmax.f32 %v470, 0.0
  %477 = vst [vmem:[%s3] sm:$0xff] %v473
  %478 = vst [vmem:[%s3 + $0x8] sm:$0xff] %v474
  %479 = vst [vmem:[%s3 + $0x10] sm:$0xff] %v475
  %480 = vst [vmem:[%s3 + $0x18] sm:$0xff] %v476
  // Predicated region
  $region14: #{hourglass_forward.21} parent=0 // pred_check
    _
  $region15: #{hourglass_forward.21} parent=0 // pred_check_branch
    %482 = sbr.rel (0) target = $region17
  $region16: #{hourglass_forward.21} parent=0 // pred_region
    _
  $region17: #{hourglass_forward.21} parent=0 // pred_fallthru
    _
  // Predicated region
  $region18: #{hourglass_forward.21} parent=0 // pred_check
    _
  $region19: #{hourglass_forward.21} parent=0 // pred_check_branch
    %484 = sbr.rel (0) target = $region21
  $region20: #{hourglass_forward.21} parent=0 // pred_region
    _
  $region21: #{hourglass_forward.21} parent=0 // pred_fallthru
    _

// kernel: hourglass_forward.22
$region0: #{hourglass_forward.22}
  #allocation0 [shape = 'u32[]', space=smem, size = 0x4, offset = 0x4, fixed_abs, tag = 'smem constant byte address 0x4 - core index']
  #allocation1 [shape = 'u32[72,128]{1,0:T(1,128)}', space=vmem, size = 0x9000, scoped, tag = 'internal scratch']
  %s0 = inlined_call_operand.vmem [shape: bf16[8,216], index: 0, kind: input, shape index: {}]
  %s1 = inlined_call_operand.vmem [shape: f32[8,1], index: 1, kind: input, shape index: {}]
  %s2 = inlined_call_operand.vmem [shape: bf16[216,64], index: 2, kind: input, shape index: {}]
  %s3 = inlined_call_operand.vmem [shape: f32[8,64], index: 3, kind: output, shape index: {}]
  %s4 = sld [smem:[#allocation0]]
  $region22: #{hourglass_forward.22} parent=0
    _
  %s6 = ssub.s32 1, %s4
  %s7 = scalar_select 0, %s6, %s4
  // Predicated region
  $region2: #{hourglass_forward.22} parent=0 // pred_check
    _
  $region3: #{hourglass_forward.22} parent=0 // pred_check_branch
    %9 = sbr.rel (0) target = $region5
  $region4: #{hourglass_forward.22} parent=0 // pred_region
    _
  $region5: #{hourglass_forward.22} parent=0 // pred_fallthru
    _
  // Predicated region
  $region6: #{hourglass_forward.22} parent=0 // pred_check
    _
  $region7: #{hourglass_forward.22} parent=0 // pred_check_branch
    %11 = sbr.rel (0) target = $region9
  $region8: #{hourglass_forward.22} parent=0 // pred_region
    _
  $region9: #{hourglass_forward.22} parent=0 // pred_fallthru
    _
  // Predicated region
  $region10: #{hourglass_forward.22} parent=0 // pred_check
    _
  $region11: #{hourglass_forward.22} parent=0 // pred_check_branch
    %13 = sbr.rel (0) target = $region13
  $region12: #{hourglass_forward.22} parent=0 // pred_region
    _
  $region13: #{hourglass_forward.22} parent=0 // pred_fallthru
    _
  %v15 = vld [vmem:[%s0] sm:$0xff]
  %v16 = vld [vmem:[%s2] sm:$0xf]
  %v17 = vld [vmem:[%s2 + $0x4] sm:$0xf]
  %v18 = vld [vmem:[%s2 + $0x8] sm:$0xf]
  %v19 = vld [vmem:[%s2 + $0xc] sm:$0xf]
  %v20 = vld [vmem:[%s2 + $0x10] sm:$0xf]
  %v21 = vld [vmem:[%s2 + $0x14] sm:$0xf]
  %v22 = vld [vmem:[%s2 + $0x18] sm:$0xf]
  %v23 = vld [vmem:[%s2 + $0x1c] sm:$0xf]
  %v24 = vld [vmem:[%s2 + $0x20] sm:$0xf]
  %v25 = vld [vmem:[%s2 + $0x24] sm:$0xf]
  %v26 = vld [vmem:[%s2 + $0x28] sm:$0xf]
  %v27 = vld [vmem:[%s2 + $0x2c] sm:$0xf]
  %v28 = vld [vmem:[%s2 + $0x30] sm:$0xf]
  %v29 = vld [vmem:[%s2 + $0x34] sm:$0xf]
  %v30 = vld [vmem:[%s2 + $0x38] sm:$0xf]
  %v31 = vld [vmem:[%s2 + $0x3c] sm:$0xf]
  %v32 = vld [vmem:[%s2 + $0x40] sm:$0xf]
  %v33 = vld [vmem:[%s2 + $0x44] sm:$0xf]
  %v34 = vld [vmem:[%s2 + $0x48] sm:$0xf]
  %v35 = vld [vmem:[%s2 + $0x4c] sm:$0xf]
  %v36 = vld [vmem:[%s2 + $0x50] sm:$0xf]
  %v37 = vld [vmem:[%s2 + $0x54] sm:$0xf]
  %v38 = vld [vmem:[%s2 + $0x58] sm:$0xf]
  %v39 = vld [vmem:[%s2 + $0x5c] sm:$0xf]
  %v40 = vld [vmem:[%s2 + $0x60] sm:$0xf]
  %v41 = vld [vmem:[%s2 + $0x64] sm:$0xf]
  %v42 = vld [vmem:[%s2 + $0x68] sm:$0xf]
  %v43 = vld [vmem:[%s1] sm:$0xff]
  %45 = vset.pattern.permute.xlu0 0
  %46 = vperm.xlu0 %45, %v43
  %v47 = vpop.permute.xlu0 %46
  %v50 = vunpack.c.l.b16 %v15
  %v51 = vunpack.c.h.b16 %v15
  %v52 = vpack.c.b16 %v50, %v50
  %v53 = vpack.c.b16 %v51, %v51
  %v82 = vunpack.c.l.b16 %v16
  %v83 = vunpack.c.l.b16 %v17
  %v84 = vunpack.c.l.b16 %v18
  %v85 = vunpack.c.l.b16 %v19
  %v86 = vunpack.c.l.b16 %v20
  %v87 = vunpack.c.l.b16 %v21
  %v88 = vunpack.c.l.b16 %v22
  %v89 = vunpack.c.l.b16 %v23
  %v90 = vunpack.c.l.b16 %v24
  %v91 = vunpack.c.l.b16 %v25
  %v92 = vunpack.c.l.b16 %v26
  %v93 = vunpack.c.l.b16 %v27
  %v94 = vunpack.c.l.b16 %v28
  %v95 = vunpack.c.l.b16 %v29
  %v96 = vunpack.c.l.b16 %v30
  %v97 = vunpack.c.l.b16 %v31
  %v98 = vunpack.c.l.b16 %v32
  %v99 = vunpack.c.l.b16 %v33
  %v100 = vunpack.c.l.b16 %v34
  %v101 = vunpack.c.l.b16 %v35
  %v102 = vunpack.c.l.b16 %v36
  %v103 = vunpack.c.l.b16 %v37
  %v104 = vunpack.c.l.b16 %v38
  %v105 = vunpack.c.l.b16 %v39
  %v106 = vunpack.c.l.b16 %v40
  %v107 = vunpack.c.l.b16 %v41
  %v108 = vunpack.c.l.b16 %v42
  %v109 = vpack.c.b16 %v83, %v82
  %v110 = vpack.c.b16 %v85, %v84
  %v111 = vpack.c.b16 %v87, %v86
  %v112 = vpack.c.b16 %v89, %v88
  %v113 = vpack.c.b16 %v91, %v90
  %v114 = vpack.c.b16 %v93, %v92
  %v115 = vpack.c.b16 %v95, %v94
  %v116 = vpack.c.b16 %v97, %v96
  %v117 = vpack.c.b16 %v99, %v98
  %v118 = vpack.c.b16 %v101, %v100
  %v119 = vpack.c.b16 %v103, %v102
  %v120 = vpack.c.b16 %v105, %v104
  %v121 = vpack.c.b16 %v107, %v106
  %v122 = vpack.c.b16 %v108, %v108
  %vm136 = vcmask 719872
  %v138 = vsel %vm136, %v53, 0
  %vm140 = vcmask 1043456
  %v142 = vsel %vm140, %v122, 0
  %144 = vmatpush.bf16.msra.mxu0 %v116
  %145 = vmatpush.bf16.msra.mxu0 %v115
  %146 = vmatpush.bf16.msra.mxu0 %v114
  %147 = vmatpush.bf16.msra.mxu0 %v113
  %148 = vmatpush.bf16.msra.mxu0 %v112
  %149 = vmatpush.bf16.msra.mxu0 %v111
  %150 = vmatpush.bf16.msra.mxu0 %v110
  %151 = vmatpush.bf16.msra.mxu0 %v109
  %152 = vmatmul.bf16.gmra.mxu0 %v52
  %v153 = vpop.f32.mrf.mxu0
  %v154 = vadd.f32 %v47, %v153
  %v155 = vpop.f32.mrf.mxu0
  %156 = vdwg.mxu0
  %157 = vmatpush.bf16.msra.mxu0 0
  %158 = vmatpush.bf16.msra.mxu0 0
  %159 = vmatpush.bf16.msra.mxu0 %v142
  %160 = vmatpush.bf16.msra.mxu0 %v121
  %161 = vmatpush.bf16.msra.mxu0 %v120
  %162 = vmatpush.bf16.msra.mxu0 %v119
  %163 = vmatpush.bf16.msra.mxu0 %v118
  %164 = vmatpush.bf16.msra.mxu0 %v117
  %165 = vmatmul.bf16.gmra.mxu0 %v138
  %v166 = vpop.f32.mrf.mxu0
  %v167 = vadd.f32 %v154, %v166
  %v168 = vpop.f32.mrf.mxu0
  %169 = vdwg.mxu0
  %v170 = vmax.f32 %v167, 0.0
  %vm171 = vcmask 523264
  %172 = vst.msk [vmem:[%s3] sm:$0xff] %vm171, %v170
  // Predicated region
  $region14: #{hourglass_forward.22} parent=0 // pred_check
    _
  $region15: #{hourglass_forward.22} parent=0 // pred_check_branch
    %174 = sbr.rel (0) target = $region17
  $region16: #{hourglass_forward.22} parent=0 // pred_region
    _
  $region17: #{hourglass_forward.22} parent=0 // pred_fallthru
    _
  // Predicated region
  $region18: #{hourglass_forward.22} parent=0 // pred_check
    _
  $region19: #{hourglass_forward.22} parent=0 // pred_check_branch
    %176 = sbr.rel (0) target = $region21
  $region20: #{hourglass_forward.22} parent=0 // pred_region
    _
  $region21: #{hourglass_forward.22} parent=0 // pred_fallthru
    _

// kernel: hourglass_forward.24
$region0: #{hourglass_forward.24}
  #allocation0 [shape = 'u32[]', space=smem, size = 0x4, offset = 0x4, fixed_abs, tag = 'smem constant byte address 0x4 - core index']
  #allocation1 [shape = 'u32[72,128]{1,0:T(1,128)}', space=vmem, size = 0x9000, scoped, tag = 'internal scratch']
  %s0 = inlined_call_operand.vmem [shape: bf16[8,8], index: 0, kind: input, shape index: {}]
  %s1 = inlined_call_operand.vmem [shape: f32[8,1], index: 1, kind: input, shape index: {}]
  %s2 = inlined_call_operand.vmem [shape: bf16[8,64], index: 2, kind: input, shape index: {}]
  %s3 = inlined_call_operand.vmem [shape: f32[8,64], index: 3, kind: input, shape index: {}]
  %s4 = inlined_call_operand.vmem [shape: f32[8,64], index: 4, kind: output, shape index: {}]
  %s5 = sld [smem:[#allocation0]]
  $region26: #{hourglass_forward.24} parent=0
    _
  %s7 = ssub.s32 1, %s5
  %s8 = scalar_select 0, %s7, %s5
  // Predicated region
  $region2: #{hourglass_forward.24} parent=0 // pred_check
    _
  $region3: #{hourglass_forward.24} parent=0 // pred_check_branch
    %10 = sbr.rel (0) target = $region5
  $region4: #{hourglass_forward.24} parent=0 // pred_region
    _
  $region5: #{hourglass_forward.24} parent=0 // pred_fallthru
    _
  // Predicated region
  $region6: #{hourglass_forward.24} parent=0 // pred_check
    _
  $region7: #{hourglass_forward.24} parent=0 // pred_check_branch
    %12 = sbr.rel (0) target = $region9
  $region8: #{hourglass_forward.24} parent=0 // pred_region
    _
  $region9: #{hourglass_forward.24} parent=0 // pred_fallthru
    _
  // Predicated region
  $region10: #{hourglass_forward.24} parent=0 // pred_check
    _
  $region11: #{hourglass_forward.24} parent=0 // pred_check_branch
    %14 = sbr.rel (0) target = $region13
  $region12: #{hourglass_forward.24} parent=0 // pred_region
    _
  $region13: #{hourglass_forward.24} parent=0 // pred_fallthru
    _
  // Predicated region
  $region14: #{hourglass_forward.24} parent=0 // pred_check
    _
  $region15: #{hourglass_forward.24} parent=0 // pred_check_branch
    %16 = sbr.rel (0) target = $region17
  $region16: #{hourglass_forward.24} parent=0 // pred_region
    _
  $region17: #{hourglass_forward.24} parent=0 // pred_fallthru
    _
  %v18 = vld [vmem:[%s0] sm:$0xf]
  %v19 = vld [vmem:[%s2] sm:$0xf]
  %v20 = vld [vmem:[%s1] sm:$0xff]
  %22 = vset.pattern.permute.xlu0 0
  %23 = vperm.xlu0 %22, %v20
  %v24 = vpop.permute.xlu0 %23
  %vm26 = vcmask 64512
  %v28 = vsel %vm26, %v18, 0
  %vm30 = vcmask 1043456
  %v32 = vsel %vm30, %v19, 0
  %34 = vmatpush.bf16.msra.mxu0 0
  %35 = vmatpush.bf16.msra.mxu0 0
  %36 = vmatpush.bf16.msra.mxu0 0
  %37 = vmatpush.bf16.msra.mxu0 0
  %38 = vmatpush.bf16.msra.mxu0 0
  %39 = vmatpush.bf16.msra.mxu0 0
  %40 = vmatpush.bf16.msra.mxu0 0
  %41 = vmatpush.bf16.msra.mxu0 %v32
  %42 = vmatmul.bf16.gmra.mxu0 %v28
  %v43 = vpop.f32.mrf.mxu0
  %v44 = vadd.f32 %v24, %v43
  %v45 = vpop.f32.mrf.mxu0
  %46 = vdwg.mxu0
  %v47 = vld [vmem:[%s3] sm:$0xff]
  %v48 = vadd.f32 %v44, %v47
  %v49 = vmax.f32 %v48, 0.0
  %vm50 = vcmask 523264
  %51 = vst.msk [vmem:[%s4] sm:$0xff] %vm50, %v49
  // Predicated region
  $region18: #{hourglass_forward.24} parent=0 // pred_check
    _
  $region19: #{hourglass_forward.24} parent=0 // pred_check_branch
    %53 = sbr.rel (0) target = $region21
  $region20: #{hourglass_forward.24} parent=0 // pred_region
    _
  $region21: #{hourglass_forward.24} parent=0 // pred_fallthru
    _
  // Predicated region
  $region22: #{hourglass_forward.24} parent=0 // pred_check
    _
  $region23: #{hourglass_forward.24} parent=0 // pred_check_branch
    %55 = sbr.rel (0) target = $region25
  $region24: #{hourglass_forward.24} parent=0 // pred_region
    _
  $region25: #{hourglass_forward.24} parent=0 // pred_fallthru
    _

// kernel: hourglass_forward.25
$region0: #{hourglass_forward.25}
  #allocation0 [shape = 'u32[]', space=smem, size = 0x4, offset = 0x4, fixed_abs, tag = 'smem constant byte address 0x4 - core index']
  #allocation1 [shape = 'u32[72,128]{1,0:T(1,128)}', space=vmem, size = 0x9000, scoped, tag = 'internal scratch']
  %s0 = inlined_call_operand.vmem [shape: bf16[8,16], index: 0, kind: input, shape index: {}]
  %s1 = inlined_call_operand.vmem [shape: f32[8,1], index: 1, kind: input, shape index: {}]
  %s2 = inlined_call_operand.vmem [shape: bf16[16,64], index: 2, kind: input, shape index: {}]
  %s3 = inlined_call_operand.vmem [shape: f32[8,64], index: 3, kind: input, shape index: {}]
  %s4 = inlined_call_operand.vmem [shape: f32[8,64], index: 4, kind: output, shape index: {}]
  %s5 = sld [smem:[#allocation0]]
  $region26: #{hourglass_forward.25} parent=0
    _
  %s7 = ssub.s32 1, %s5
  %s8 = scalar_select 0, %s7, %s5
  // Predicated region
  $region2: #{hourglass_forward.25} parent=0 // pred_check
    _
  $region3: #{hourglass_forward.25} parent=0 // pred_check_branch
    %10 = sbr.rel (0) target = $region5
  $region4: #{hourglass_forward.25} parent=0 // pred_region
    _
  $region5: #{hourglass_forward.25} parent=0 // pred_fallthru
    _
  // Predicated region
  $region6: #{hourglass_forward.25} parent=0 // pred_check
    _
  $region7: #{hourglass_forward.25} parent=0 // pred_check_branch
    %12 = sbr.rel (0) target = $region9
  $region8: #{hourglass_forward.25} parent=0 // pred_region
    _
  $region9: #{hourglass_forward.25} parent=0 // pred_fallthru
    _
  // Predicated region
  $region10: #{hourglass_forward.25} parent=0 // pred_check
    _
  $region11: #{hourglass_forward.25} parent=0 // pred_check_branch
    %14 = sbr.rel (0) target = $region13
  $region12: #{hourglass_forward.25} parent=0 // pred_region
    _
  $region13: #{hourglass_forward.25} parent=0 // pred_fallthru
    _
  // Predicated region
  $region14: #{hourglass_forward.25} parent=0 // pred_check
    _
  $region15: #{hourglass_forward.25} parent=0 // pred_check_branch
    %16 = sbr.rel (0) target = $region17
  $region16: #{hourglass_forward.25} parent=0 // pred_region
    _
  $region17: #{hourglass_forward.25} parent=0 // pred_fallthru
    _
  %v18 = vld [vmem:[%s0] sm:$0xf]
  %v19 = vld [vmem:[%s2] sm:$0xf]
  %v20 = vld [vmem:[%s2 + $0x4] sm:$0xf]
  %v21 = vld [vmem:[%s1] sm:$0xff]
  %23 = vset.pattern.permute.xlu0 0
  %24 = vperm.xlu0 %23, %v21
  %v25 = vpop.permute.xlu0 %24
  %v29 = vunpack.c.l.b16 %v19
  %v30 = vunpack.c.l.b16 %v20
  %v31 = vpack.c.b16 %v30, %v29
  %vm33 = vcmask 130048
  %v35 = vsel %vm33, %v18, 0
  %37 = vmatpush.bf16.msra.mxu0 0
  %38 = vmatpush.bf16.msra.mxu0 0
  %39 = vmatpush.bf16.msra.mxu0 0
  %40 = vmatpush.bf16.msra.mxu0 0
  %41 = vmatpush.bf16.msra.mxu0 0
  %42 = vmatpush.bf16.msra.mxu0 0
  %43 = vmatpush.bf16.msra.mxu0 0
  %44 = vmatpush.bf16.msra.mxu0 %v31
  %45 = vmatmul.bf16.gmra.mxu0 %v35
  %v46 = vpop.f32.mrf.mxu0
  %v47 = vadd.f32 %v25, %v46
  %v48 = vpop.f32.mrf.mxu0
  %49 = vdwg.mxu0
  %v50 = vld [vmem:[%s3] sm:$0xff]
  %v51 = vadd.f32 %v47, %v50
  %v52 = vmax.f32 %v51, 0.0
  %vm53 = vcmask 523264
  %54 = vst.msk [vmem:[%s4] sm:$0xff] %vm53, %v52
  // Predicated region
  $region18: #{hourglass_forward.25} parent=0 // pred_check
    _
  $region19: #{hourglass_forward.25} parent=0 // pred_check_branch
    %56 = sbr.rel (0) target = $region21
  $region20: #{hourglass_forward.25} parent=0 // pred_region
    _
  $region21: #{hourglass_forward.25} parent=0 // pred_fallthru
    _
  // Predicated region
  $region22: #{hourglass_forward.25} parent=0 // pred_check
    _
  $region23: #{hourglass_forward.25} parent=0 // pred_check_branch
    %58 = sbr.rel (0) target = $region25
  $region24: #{hourglass_forward.25} parent=0 // pred_region
    _
  $region25: #{hourglass_forward.25} parent=0 // pred_fallthru
    _

// kernel: hourglass_forward.31
$region0: #{hourglass_forward.31}
  #allocation0 [shape = 'u32[]', space=smem, size = 0x4, offset = 0x4, fixed_abs, tag = 'smem constant byte address 0x4 - core index']
  #allocation1 [shape = 'u32[72,128]{1,0:T(1,128)}', space=vmem, size = 0x9000, scoped, tag = 'internal scratch']
  %s0 = inlined_call_operand.vmem [shape: bf16[8,64], index: 0, kind: input, shape index: {}]
  %s1 = inlined_call_operand.vmem [shape: f32[8,1], index: 1, kind: input, shape index: {}]
  %s2 = inlined_call_operand.vmem [shape: bf16[64,64], index: 2, kind: input, shape index: {}]
  %s3 = inlined_call_operand.vmem [shape: f32[8,64], index: 3, kind: input, shape index: {}]
  %s4 = inlined_call_operand.vmem [shape: f32[8,64], index: 4, kind: output, shape index: {}]
  %s5 = sld [smem:[#allocation0]]
  $region26: #{hourglass_forward.31} parent=0
    _
  %s7 = ssub.s32 1, %s5
  %s8 = scalar_select 0, %s7, %s5
  // Predicated region
  $region2: #{hourglass_forward.31} parent=0 // pred_check
    _
  $region3: #{hourglass_forward.31} parent=0 // pred_check_branch
    %10 = sbr.rel (0) target = $region5
  $region4: #{hourglass_forward.31} parent=0 // pred_region
    _
  $region5: #{hourglass_forward.31} parent=0 // pred_fallthru
    _
  // Predicated region
  $region6: #{hourglass_forward.31} parent=0 // pred_check
    _
  $region7: #{hourglass_forward.31} parent=0 // pred_check_branch
    %12 = sbr.rel (0) target = $region9
  $region8: #{hourglass_forward.31} parent=0 // pred_region
    _
  $region9: #{hourglass_forward.31} parent=0 // pred_fallthru
    _
  // Predicated region
  $region10: #{hourglass_forward.31} parent=0 // pred_check
    _
  $region11: #{hourglass_forward.31} parent=0 // pred_check_branch
    %14 = sbr.rel (0) target = $region13
  $region12: #{hourglass_forward.31} parent=0 // pred_region
    _
  $region13: #{hourglass_forward.31} parent=0 // pred_fallthru
    _
  // Predicated region
  $region14: #{hourglass_forward.31} parent=0 // pred_check
    _
  $region15: #{hourglass_forward.31} parent=0 // pred_check_branch
    %16 = sbr.rel (0) target = $region17
  $region16: #{hourglass_forward.31} parent=0 // pred_region
    _
  $region17: #{hourglass_forward.31} parent=0 // pred_fallthru
    _
  %v18 = vld [vmem:[%s0] sm:$0xf]
  %v19 = vld [vmem:[%s2] sm:$0xf]
  %v20 = vld [vmem:[%s2 + $0x4] sm:$0xf]
  %v21 = vld [vmem:[%s2 + $0x8] sm:$0xf]
  %v22 = vld [vmem:[%s2 + $0xc] sm:$0xf]
  %v23 = vld [vmem:[%s2 + $0x10] sm:$0xf]
  %v24 = vld [vmem:[%s2 + $0x14] sm:$0xf]
  %v25 = vld [vmem:[%s2 + $0x18] sm:$0xf]
  %v26 = vld [vmem:[%s2 + $0x1c] sm:$0xf]
  %v27 = vld [vmem:[%s1] sm:$0xff]
  %29 = vset.pattern.permute.xlu0 0
  %30 = vperm.xlu0 %29, %v27
  %v31 = vpop.permute.xlu0 %30
  %v41 = vunpack.c.l.b16 %v19
  %v42 = vunpack.c.l.b16 %v20
  %v43 = vunpack.c.l.b16 %v21
  %v44 = vunpack.c.l.b16 %v22
  %v45 = vunpack.c.l.b16 %v23
  %v46 = vunpack.c.l.b16 %v24
  %v47 = vunpack.c.l.b16 %v25
  %v48 = vunpack.c.l.b16 %v26
  %v49 = vpack.c.b16 %v42, %v41
  %v50 = vpack.c.b16 %v44, %v43
  %v51 = vpack.c.b16 %v46, %v45
  %v52 = vpack.c.b16 %v48, %v47
  %vm57 = vcmask 523264
  %v59 = vsel %vm57, %v18, 0
  %61 = vmatpush.bf16.msra.mxu0 0
  %62 = vmatpush.bf16.msra.mxu0 0
  %63 = vmatpush.bf16.msra.mxu0 0
  %64 = vmatpush.bf16.msra.mxu0 0
  %65 = vmatpush.bf16.msra.mxu0 %v52
  %66 = vmatpush.bf16.msra.mxu0 %v51
  %67 = vmatpush.bf16.msra.mxu0 %v50
  %68 = vmatpush.bf16.msra.mxu0 %v49
  %69 = vmatmul.bf16.gmra.mxu0 %v59
  %v70 = vpop.f32.mrf.mxu0
  %v71 = vadd.f32 %v31, %v70
  %v72 = vpop.f32.mrf.mxu0
  %73 = vdwg.mxu0
  %v74 = vld [vmem:[%s3] sm:$0xff]
  %v75 = vadd.f32 %v71, %v74
  %v76 = vmax.f32 %v75, 0.0
  %77 = vst.msk [vmem:[%s4] sm:$0xff] %vm57, %v76
  // Predicated region
  $region18: #{hourglass_forward.31} parent=0 // pred_check
    _
  $region19: #{hourglass_forward.31} parent=0 // pred_check_branch
    %79 = sbr.rel (0) target = $region21
  $region20: #{hourglass_forward.31} parent=0 // pred_region
    _
  $region21: #{hourglass_forward.31} parent=0 // pred_fallthru
    _
  // Predicated region
  $region22: #{hourglass_forward.31} parent=0 // pred_check
    _
  $region23: #{hourglass_forward.31} parent=0 // pred_check_branch
    %81 = sbr.rel (0) target = $region25
  $region24: #{hourglass_forward.31} parent=0 // pred_region
    _
  $region25: #{hourglass_forward.31} parent=0 // pred_fallthru
    _

// kernel: hourglass_forward.29
$region0: #{hourglass_forward.29}
  #allocation0 [shape = 'u32[]', space=smem, size = 0x4, offset = 0x4, fixed_abs, tag = 'smem constant byte address 0x4 - core index']
  #allocation1 [shape = 'u32[72,128]{1,0:T(1,128)}', space=vmem, size = 0x9000, scoped, tag = 'internal scratch']
  %s0 = inlined_call_operand.vmem [shape: bf16[8,32], index: 0, kind: input, shape index: {}]
  %s1 = inlined_call_operand.vmem [shape: f32[8,1], index: 1, kind: input, shape index: {}]
  %s2 = inlined_call_operand.vmem [shape: bf16[32,64], index: 2, kind: input, shape index: {}]
  %s3 = inlined_call_operand.vmem [shape: f32[8,64], index: 3, kind: input, shape index: {}]
  %s4 = inlined_call_operand.vmem [shape: f32[8,64], index: 4, kind: output, shape index: {}]
  %s5 = sld [smem:[#allocation0]]
  $region26: #{hourglass_forward.29} parent=0
    _
  %s7 = ssub.s32 1, %s5
  %s8 = scalar_select 0, %s7, %s5
  // Predicated region
  $region2: #{hourglass_forward.29} parent=0 // pred_check
    _
  $region3: #{hourglass_forward.29} parent=0 // pred_check_branch
    %10 = sbr.rel (0) target = $region5
  $region4: #{hourglass_forward.29} parent=0 // pred_region
    _
  $region5: #{hourglass_forward.29} parent=0 // pred_fallthru
    _
  // Predicated region
  $region6: #{hourglass_forward.29} parent=0 // pred_check
    _
  $region7: #{hourglass_forward.29} parent=0 // pred_check_branch
    %12 = sbr.rel (0) target = $region9
  $region8: #{hourglass_forward.29} parent=0 // pred_region
    _
  $region9: #{hourglass_forward.29} parent=0 // pred_fallthru
    _
  // Predicated region
  $region10: #{hourglass_forward.29} parent=0 // pred_check
    _
  $region11: #{hourglass_forward.29} parent=0 // pred_check_branch
    %14 = sbr.rel (0) target = $region13
  $region12: #{hourglass_forward.29} parent=0 // pred_region
    _
  $region13: #{hourglass_forward.29} parent=0 // pred_fallthru
    _
  // Predicated region
  $region14: #{hourglass_forward.29} parent=0 // pred_check
    _
  $region15: #{hourglass_forward.29} parent=0 // pred_check_branch
    %16 = sbr.rel (0) target = $region17
  $region16: #{hourglass_forward.29} parent=0 // pred_region
    _
  $region17: #{hourglass_forward.29} parent=0 // pred_fallthru
    _
  %v18 = vld [vmem:[%s0] sm:$0xf]
  %v19 = vld [vmem:[%s2] sm:$0xf]
  %v20 = vld [vmem:[%s2 + $0x4] sm:$0xf]
  %v21 = vld [vmem:[%s2 + $0x8] sm:$0xf]
  %v22 = vld [vmem:[%s2 + $0xc] sm:$0xf]
  %v23 = vld [vmem:[%s1] sm:$0xff]
  %25 = vset.pattern.permute.xlu0 0
  %26 = vperm.xlu0 %25, %v23
  %v27 = vpop.permute.xlu0 %26
  %v33 = vunpack.c.l.b16 %v19
  %v34 = vunpack.c.l.b16 %v20
  %v35 = vunpack.c.l.b16 %v21
  %v36 = vunpack.c.l.b16 %v22
  %v37 = vpack.c.b16 %v34, %v33
  %v38 = vpack.c.b16 %v36, %v35
  %vm41 = vcmask 261120
  %v43 = vsel %vm41, %v18, 0
  %45 = vmatpush.bf16.msra.mxu0 0
  %46 = vmatpush.bf16.msra.mxu0 0
  %47 = vmatpush.bf16.msra.mxu0 0
  %48 = vmatpush.bf16.msra.mxu0 0
  %49 = vmatpush.bf16.msra.mxu0 0
  %50 = vmatpush.bf16.msra.mxu0 0
  %51 = vmatpush.bf16.msra.mxu0 %v38
  %52 = vmatpush.bf16.msra.mxu0 %v37
  %53 = vmatmul.bf16.gmra.mxu0 %v43
  %v54 = vpop.f32.mrf.mxu0
  %v55 = vadd.f32 %v27, %v54
  %v56 = vpop.f32.mrf.mxu0
  %57 = vdwg.mxu0
  %v58 = vld [vmem:[%s3] sm:$0xff]
  %v59 = vadd.f32 %v55, %v58
  %v60 = vmax.f32 %v59, 0.0
  %vm61 = vcmask 523264
  %62 = vst.msk [vmem:[%s4] sm:$0xff] %vm61, %v60
  // Predicated region
  $region18: #{hourglass_forward.29} parent=0 // pred_check
    _
  $region19: #{hourglass_forward.29} parent=0 // pred_check_branch
    %64 = sbr.rel (0) target = $region21
  $region20: #{hourglass_forward.29} parent=0 // pred_region
    _
  $region21: #{hourglass_forward.29} parent=0 // pred_fallthru
    _
  // Predicated region
  $region22: #{hourglass_forward.29} parent=0 // pred_check
    _
  $region23: #{hourglass_forward.29} parent=0 // pred_check_branch
    %66 = sbr.rel (0) target = $region25
  $region24: #{hourglass_forward.29} parent=0 // pred_region
    _
  $region25: #{hourglass_forward.29} parent=0 // pred_fallthru
    _

// kernel: hourglass_forward.32
$region0: #{hourglass_forward.32}
  #allocation0 [shape = 'u32[]', space=smem, size = 0x4, offset = 0x4, fixed_abs, tag = 'smem constant byte address 0x4 - core index']
  #allocation1 [shape = 'u32[72,128]{1,0:T(1,128)}', space=vmem, size = 0x9000, scoped, tag = 'internal scratch']
  %s0 = inlined_call_operand.vmem [shape: bf16[4,8], index: 0, kind: input, shape index: {}]
  %s1 = inlined_call_operand.vmem [shape: f32[4,1], index: 1, kind: input, shape index: {}]
  %s2 = inlined_call_operand.vmem [shape: bf16[8,512], index: 2, kind: input, shape index: {}]
  %s3 = inlined_call_operand.vmem [shape: f32[4,512], index: 3, kind: output, shape index: {}]
  %s4 = sld [smem:[#allocation0]]
  $region22: #{hourglass_forward.32} parent=0
    _
  %s6 = ssub.s32 1, %s4
  %s7 = scalar_select 0, %s6, %s4
  // Predicated region
  $region2: #{hourglass_forward.32} parent=0 // pred_check
    _
  $region3: #{hourglass_forward.32} parent=0 // pred_check_branch
    %9 = sbr.rel (0) target = $region5
  $region4: #{hourglass_forward.32} parent=0 // pred_region
    _
  $region5: #{hourglass_forward.32} parent=0 // pred_fallthru
    _
  // Predicated region
  $region6: #{hourglass_forward.32} parent=0 // pred_check
    _
  $region7: #{hourglass_forward.32} parent=0 // pred_check_branch
    %11 = sbr.rel (0) target = $region9
  $region8: #{hourglass_forward.32} parent=0 // pred_region
    _
  $region9: #{hourglass_forward.32} parent=0 // pred_fallthru
    _
  // Predicated region
  $region10: #{hourglass_forward.32} parent=0 // pred_check
    _
  $region11: #{hourglass_forward.32} parent=0 // pred_check_branch
    %13 = sbr.rel (0) target = $region13
  $region12: #{hourglass_forward.32} parent=0 // pred_region
    _
  $region13: #{hourglass_forward.32} parent=0 // pred_fallthru
    _
  %v15 = vld [vmem:[%s0] sm:$0x3]
  %v16 = vld [vmem:[%s2] sm:$0xff]
  %v17 = vld [vmem:[%s2 + $0x8] sm:$0xff]
  %v18 = vld [vmem:[%s1] sm:$0xf]
  %20 = vset.pattern.permute.xlu0 0
  %21 = vperm.xlu0 %20, %v18
  %v22 = vpop.permute.xlu0 %21
  %v26 = vunpack.c.l.b16 %v16
  %v27 = vunpack.c.h.b16 %v16
  %v28 = vunpack.c.l.b16 %v17
  %v29 = vunpack.c.h.b16 %v17
  %v30 = vpack.c.b16 %v26, %v26
  %v31 = vpack.c.b16 %v27, %v27
  %v32 = vpack.c.b16 %v28, %v28
  %v33 = vpack.c.b16 %v29, %v29
  %vm34 = vcmask 64512
  %v36 = vsel %vm34, %v15, 0
  %vm38 = vcmask 1043456
  %v40 = vsel %vm38, %v30, 0
  %v43 = vsel %vm38, %v31, 0
  %v46 = vsel %vm38, %v32, 0
  %v49 = vsel %vm38, %v33, 0
  %51 = vmatpush.bf16.msra.mxu0 0
  %52 = vmatpush.bf16.msra.mxu0 0
  %53 = vmatpush.bf16.msra.mxu0 0
  %54 = vmatpush.bf16.msra.mxu0 0
  %55 = vmatpush.bf16.msra.mxu0 0
  %56 = vmatpush.bf16.msra.mxu0 0
  %57 = vmatpush.bf16.msra.mxu0 0
  %58 = vmatpush.bf16.msra.mxu0 %v40
  %59 = vmatmul.bf16.gmra.mxu0 %v36
  %v60 = vpop.f32.mrf.mxu0
  %v61 = vadd.f32 %v22, %v60
  %v62 = vpop.f32.mrf.mxu0
  %63 = vdwg.mxu0
  %64 = vmatpush.bf16.msra.mxu0 0
  %65 = vmatpush.bf16.msra.mxu0 0
  %66 = vmatpush.bf16.msra.mxu0 0
  %67 = vmatpush.bf16.msra.mxu0 0
  %68 = vmatpush.bf16.msra.mxu0 0
  %69 = vmatpush.bf16.msra.mxu0 0
  %70 = vmatpush.bf16.msra.mxu0 0
  %71 = vmatpush.bf16.msra.mxu0 %v43
  %72 = vmatmul.bf16.gmra.mxu0 %v36
  %v73 = vpop.f32.mrf.mxu0
  %v74 = vadd.f32 %v22, %v73
  %v75 = vpop.f32.mrf.mxu0
  %76 = vdwg.mxu0
  %77 = vmatpush.bf16.msra.mxu0 0
  %78 = vmatpush.bf16.msra.mxu0 0
  %79 = vmatpush.bf16.msra.mxu0 0
  %80 = vmatpush.bf16.msra.mxu0 0
  %81 = vmatpush.bf16.msra.mxu0 0
  %82 = vmatpush.bf16.msra.mxu0 0
  %83 = vmatpush.bf16.msra.mxu0 0
  %84 = vmatpush.bf16.msra.mxu0 %v46
  %85 = vmatmul.bf16.gmra.mxu0 %v36
  %v86 = vpop.f32.mrf.mxu0
  %v87 = vadd.f32 %v22, %v86
  %v88 = vpop.f32.mrf.mxu0
  %89 = vdwg.mxu0
  %90 = vmatpush.bf16.msra.mxu0 0
  %91 = vmatpush.bf16.msra.mxu0 0
  %92 = vmatpush.bf16.msra.mxu0 0
  %93 = vmatpush.bf16.msra.mxu0 0
  %94 = vmatpush.bf16.msra.mxu0 0
  %95 = vmatpush.bf16.msra.mxu0 0
  %96 = vmatpush.bf16.msra.mxu0 0
  %97 = vmatpush.bf16.msra.mxu0 %v49
  %98 = vmatmul.bf16.gmra.mxu0 %v36
  %v99 = vpop.f32.mrf.mxu0
  %v100 = vadd.f32 %v22, %v99
  %v101 = vpop.f32.mrf.mxu0
  %102 = vdwg.mxu0
  %v107 = vrot.slane %v74, 4
  %v108 = vrot.slane %v100, 4
  %v109 = vsel %vm38, %v61, %v107
  %v110 = vsel %vm38, %v87, %v108
  %113 = vst [vmem:[%s3] sm:$0xff] %v109
  %114 = vst [vmem:[%s3 + $0x8] sm:$0xff] %v110
  // Predicated region
  $region14: #{hourglass_forward.32} parent=0 // pred_check
    _
  $region15: #{hourglass_forward.32} parent=0 // pred_check_branch
    %116 = sbr.rel (0) target = $region17
  $region16: #{hourglass_forward.32} parent=0 // pred_region
    _
  $region17: #{hourglass_forward.32} parent=0 // pred_fallthru
    _
  // Predicated region
  $region18: #{hourglass_forward.32} parent=0 // pred_check
    _
  $region19: #{hourglass_forward.32} parent=0 // pred_check_branch
    %118 = sbr.rel (0) target = $region21
  $region20: #{hourglass_forward.32} parent=0 // pred_region
    _
  $region21: #{hourglass_forward.32} parent=0 // pred_fallthru
    _

// kernel: hourglass_forward.39
$region0: #{hourglass_forward.39}
  #allocation0 [shape = 'u32[]', space=smem, size = 0x4, offset = 0x4, fixed_abs, tag = 'smem constant byte address 0x4 - core index']
  #allocation1 [shape = 'u32[72,128]{1,0:T(1,128)}', space=vmem, size = 0x9000, scoped, tag = 'internal scratch']
  %s0 = inlined_call_operand.vmem [shape: bf16[4,64], index: 0, kind: input, shape index: {}]
  %s1 = inlined_call_operand.vmem [shape: f32[4,1], index: 1, kind: input, shape index: {}]
  %s2 = inlined_call_operand.vmem [shape: bf16[64,512], index: 2, kind: input, shape index: {}]
  %s3 = inlined_call_operand.vmem [shape: f32[4,512], index: 3, kind: output, shape index: {}]
  %s4 = sld [smem:[#allocation0]]
  $region22: #{hourglass_forward.39} parent=0
    _
  %s6 = ssub.s32 1, %s4
  %s7 = scalar_select 0, %s6, %s4
  // Predicated region
  $region2: #{hourglass_forward.39} parent=0 // pred_check
    _
  $region3: #{hourglass_forward.39} parent=0 // pred_check_branch
    %9 = sbr.rel (0) target = $region5
  $region4: #{hourglass_forward.39} parent=0 // pred_region
    _
  $region5: #{hourglass_forward.39} parent=0 // pred_fallthru
    _
  // Predicated region
  $region6: #{hourglass_forward.39} parent=0 // pred_check
    _
  $region7: #{hourglass_forward.39} parent=0 // pred_check_branch
    %11 = sbr.rel (0) target = $region9
  $region8: #{hourglass_forward.39} parent=0 // pred_region
    _
  $region9: #{hourglass_forward.39} parent=0 // pred_fallthru
    _
  // Predicated region
  $region10: #{hourglass_forward.39} parent=0 // pred_check
    _
  $region11: #{hourglass_forward.39} parent=0 // pred_check_branch
    %13 = sbr.rel (0) target = $region13
  $region12: #{hourglass_forward.39} parent=0 // pred_region
    _
  $region13: #{hourglass_forward.39} parent=0 // pred_fallthru
    _
  %v15 = vld [vmem:[%s0] sm:$0x3]
  %v16 = vld [vmem:[%s2] sm:$0xff]
  %v17 = vld [vmem:[%s2 + $0x8] sm:$0xff]
  %v18 = vld [vmem:[%s2 + $0x10] sm:$0xff]
  %v19 = vld [vmem:[%s2 + $0x18] sm:$0xff]
  %v20 = vld [vmem:[%s2 + $0x20] sm:$0xff]
  %v21 = vld [vmem:[%s2 + $0x28] sm:$0xff]
  %v22 = vld [vmem:[%s2 + $0x30] sm:$0xff]
  %v23 = vld [vmem:[%s2 + $0x38] sm:$0xff]
  %v24 = vld [vmem:[%s2 + $0x40] sm:$0xff]
  %v25 = vld [vmem:[%s2 + $0x48] sm:$0xff]
  %v26 = vld [vmem:[%s2 + $0x50] sm:$0xff]
  %v27 = vld [vmem:[%s2 + $0x58] sm:$0xff]
  %v28 = vld [vmem:[%s2 + $0x60] sm:$0xff]
  %v29 = vld [vmem:[%s2 + $0x68] sm:$0xff]
  %v30 = vld [vmem:[%s2 + $0x70] sm:$0xff]
  %v31 = vld [vmem:[%s2 + $0x78] sm:$0xff]
  %v32 = vld [vmem:[%s1] sm:$0xf]
  %34 = vset.pattern.permute.xlu0 0
  %35 = vperm.xlu0 %34, %v32
  %v36 = vpop.permute.xlu0 %35
  %v54 = vunpack.c.l.b16 %v16
  %v55 = vunpack.c.h.b16 %v16
  %v56 = vunpack.c.l.b16 %v17
  %v57 = vunpack.c.h.b16 %v17
  %v58 = vunpack.c.l.b16 %v18
  %v59 = vunpack.c.h.b16 %v18
  %v60 = vunpack.c.l.b16 %v19
  %v61 = vunpack.c.h.b16 %v19
  %v62 = vunpack.c.l.b16 %v20
  %v63 = vunpack.c.h.b16 %v20
  %v64 = vunpack.c.l.b16 %v21
  %v65 = vunpack.c.h.b16 %v21
  %v66 = vunpack.c.l.b16 %v22
  %v67 = vunpack.c.h.b16 %v22
  %v68 = vunpack.c.l.b16 %v23
  %v69 = vunpack.c.h.b16 %v23
  %v70 = vunpack.c.l.b16 %v24
  %v71 = vunpack.c.h.b16 %v24
  %v72 = vunpack.c.l.b16 %v25
  %v73 = vunpack.c.h.b16 %v25
  %v74 = vunpack.c.l.b16 %v26
  %v75 = vunpack.c.h.b16 %v26
  %v76 = vunpack.c.l.b16 %v27
  %v77 = vunpack.c.h.b16 %v27
  %v78 = vunpack.c.l.b16 %v28
  %v79 = vunpack.c.h.b16 %v28
  %v80 = vunpack.c.l.b16 %v29
  %v81 = vunpack.c.h.b16 %v29
  %v82 = vunpack.c.l.b16 %v30
  %v83 = vunpack.c.h.b16 %v30
  %v84 = vunpack.c.l.b16 %v31
  %v85 = vunpack.c.h.b16 %v31
  %v86 = vpack.c.b16 %v58, %v54
  %v87 = vpack.c.b16 %v59, %v55
  %v88 = vpack.c.b16 %v60, %v56
  %v89 = vpack.c.b16 %v61, %v57
  %v90 = vpack.c.b16 %v66, %v62
  %v91 = vpack.c.b16 %v67, %v63
  %v92 = vpack.c.b16 %v68, %v64
  %v93 = vpack.c.b16 %v69, %v65
  %v94 = vpack.c.b16 %v74, %v70
  %v95 = vpack.c.b16 %v75, %v71
  %v96 = vpack.c.b16 %v76, %v72
  %v97 = vpack.c.b16 %v77, %v73
  %v98 = vpack.c.b16 %v82, %v78
  %v99 = vpack.c.b16 %v83, %v79
  %v100 = vpack.c.b16 %v84, %v80
  %v101 = vpack.c.b16 %v85, %v81
  %vm118 = vcmask 523264
  %v120 = vsel %vm118, %v15, 0
  %122 = vmatpush.bf16.msra.mxu0 0
  %123 = vmatpush.bf16.msra.mxu0 0
  %124 = vmatpush.bf16.msra.mxu0 0
  %125 = vmatpush.bf16.msra.mxu0 0
  %126 = vmatpush.bf16.msra.mxu0 %v98
  %127 = vmatpush.bf16.msra.mxu0 %v94
  %128 = vmatpush.bf16.msra.mxu0 %v90
  %129 = vmatpush.bf16.msra.mxu0 %v86
  %130 = vmatmul.bf16.gmra.mxu0 %v120
  %v131 = vpop.f32.mrf.mxu0
  %v132 = vadd.f32 %v36, %v131
  %v133 = vpop.f32.mrf.mxu0
  %134 = vdwg.mxu0
  %135 = vmatpush.bf16.msra.mxu0 0
  %136 = vmatpush.bf16.msra.mxu0 0
  %137 = vmatpush.bf16.msra.mxu0 0
  %138 = vmatpush.bf16.msra.mxu0 0
  %139 = vmatpush.bf16.msra.mxu0 %v99
  %140 = vmatpush.bf16.msra.mxu0 %v95
  %141 = vmatpush.bf16.msra.mxu0 %v91
  %142 = vmatpush.bf16.msra.mxu0 %v87
  %143 = vmatmul.bf16.gmra.mxu0 %v120
  %v144 = vpop.f32.mrf.mxu0
  %v145 = vadd.f32 %v36, %v144
  %v146 = vpop.f32.mrf.mxu0
  %147 = vdwg.mxu0
  %148 = vmatpush.bf16.msra.mxu0 0
  %149 = vmatpush.bf16.msra.mxu0 0
  %150 = vmatpush.bf16.msra.mxu0 0
  %151 = vmatpush.bf16.msra.mxu0 0
  %152 = vmatpush.bf16.msra.mxu0 %v100
  %153 = vmatpush.bf16.msra.mxu0 %v96
  %154 = vmatpush.bf16.msra.mxu0 %v92
  %155 = vmatpush.bf16.msra.mxu0 %v88
  %156 = vmatmul.bf16.gmra.mxu0 %v120
  %v157 = vpop.f32.mrf.mxu0
  %v158 = vadd.f32 %v36, %v157
  %v159 = vpop.f32.mrf.mxu0
  %160 = vdwg.mxu0
  %161 = vmatpush.bf16.msra.mxu0 0
  %162 = vmatpush.bf16.msra.mxu0 0
  %163 = vmatpush.bf16.msra.mxu0 0
  %164 = vmatpush.bf16.msra.mxu0 0
  %165 = vmatpush.bf16.msra.mxu0 %v101
  %166 = vmatpush.bf16.msra.mxu0 %v97
  %167 = vmatpush.bf16.msra.mxu0 %v93
  %168 = vmatpush.bf16.msra.mxu0 %v89
  %169 = vmatmul.bf16.gmra.mxu0 %v120
  %v170 = vpop.f32.mrf.mxu0
  %v171 = vadd.f32 %v36, %v170
  %v172 = vpop.f32.mrf.mxu0
  %173 = vdwg.mxu0
  %v178 = vrot.slane %v145, 4
  %v179 = vrot.slane %v171, 4
  %vm180 = vcmask 1043456
  %v181 = vsel %vm180, %v132, %v178
  %v182 = vsel %vm180, %v158, %v179
  %185 = vst [vmem:[%s3] sm:$0xff] %v181
  %186 = vst [vmem:[%s3 + $0x8] sm:$0xff] %v182
  // Predicated region
  $region14: #{hourglass_forward.39} parent=0 // pred_check
    _
  $region15: #{hourglass_forward.39} parent=0 // pred_check_branch
    %188 = sbr.rel (0) target = $region17
  $region16: #{hourglass_forward.39} parent=0 // pred_region
    _
  $region17: #{hourglass_forward.39} parent=0 // pred_fallthru
    _
  // Predicated region
  $region18: #{hourglass_forward.39} parent=0 // pred_check
    _
  $region19: #{hourglass_forward.39} parent=0 // pred_check_branch
    %190 = sbr.rel (0) target = $region21
  $region20: #{hourglass_forward.39} parent=0 // pred_region
    _
  $region21: #{hourglass_forward.39} parent=0 // pred_fallthru
    _

// kernel: hourglass_forward.36
$region0: #{hourglass_forward.36}
  #allocation0 [shape = 'u32[]', space=smem, size = 0x4, offset = 0x4, fixed_abs, tag = 'smem constant byte address 0x4 - core index']
  #allocation1 [shape = 'u32[72,128]{1,0:T(1,128)}', space=vmem, size = 0x9000, scoped, tag = 'internal scratch']
  %s0 = inlined_call_operand.vmem [shape: bf16[4,16], index: 0, kind: input, shape index: {}]
  %s1 = inlined_call_operand.vmem [shape: f32[4,1], index: 1, kind: input, shape index: {}]
  %s2 = inlined_call_operand.vmem [shape: bf16[16,512], index: 2, kind: input, shape index: {}]
  %s3 = inlined_call_operand.vmem [shape: f32[4,512], index: 3, kind: output, shape index: {}]
  %s4 = sld [smem:[#allocation0]]
  $region22: #{hourglass_forward.36} parent=0
    _
  %s6 = ssub.s32 1, %s4
  %s7 = scalar_select 0, %s6, %s4
  // Predicated region
  $region2: #{hourglass_forward.36} parent=0 // pred_check
    _
  $region3: #{hourglass_forward.36} parent=0 // pred_check_branch
    %9 = sbr.rel (0) target = $region5
  $region4: #{hourglass_forward.36} parent=0 // pred_region
    _
  $region5: #{hourglass_forward.36} parent=0 // pred_fallthru
    _
  // Predicated region
  $region6: #{hourglass_forward.36} parent=0 // pred_check
    _
  $region7: #{hourglass_forward.36} parent=0 // pred_check_branch
    %11 = sbr.rel (0) target = $region9
  $region8: #{hourglass_forward.36} parent=0 // pred_region
    _
  $region9: #{hourglass_forward.36} parent=0 // pred_fallthru
    _
  // Predicated region
  $region10: #{hourglass_forward.36} parent=0 // pred_check
    _
  $region11: #{hourglass_forward.36} parent=0 // pred_check_branch
    %13 = sbr.rel (0) target = $region13
  $region12: #{hourglass_forward.36} parent=0 // pred_region
    _
  $region13: #{hourglass_forward.36} parent=0 // pred_fallthru
    _
  %v15 = vld [vmem:[%s0] sm:$0x3]
  %v16 = vld [vmem:[%s2] sm:$0xff]
  %v17 = vld [vmem:[%s2 + $0x8] sm:$0xff]
  %v18 = vld [vmem:[%s2 + $0x10] sm:$0xff]
  %v19 = vld [vmem:[%s2 + $0x18] sm:$0xff]
  %v20 = vld [vmem:[%s1] sm:$0xf]
  %22 = vset.pattern.permute.xlu0 0
  %23 = vperm.xlu0 %22, %v20
  %v24 = vpop.permute.xlu0 %23
  %v30 = vunpack.c.l.b16 %v16
  %v31 = vunpack.c.h.b16 %v16
  %v32 = vunpack.c.l.b16 %v17
  %v33 = vunpack.c.h.b16 %v17
  %v34 = vunpack.c.l.b16 %v18
  %v35 = vunpack.c.h.b16 %v18
  %v36 = vunpack.c.l.b16 %v19
  %v37 = vunpack.c.h.b16 %v19
  %v38 = vpack.c.b16 %v34, %v30
  %v39 = vpack.c.b16 %v35, %v31
  %v40 = vpack.c.b16 %v36, %v32
  %v41 = vpack.c.b16 %v37, %v33
  %vm46 = vcmask 130048
  %v48 = vsel %vm46, %v15, 0
  %50 = vmatpush.bf16.msra.mxu0 0
  %51 = vmatpush.bf16.msra.mxu0 0
  %52 = vmatpush.bf16.msra.mxu0 0
  %53 = vmatpush.bf16.msra.mxu0 0
  %54 = vmatpush.bf16.msra.mxu0 0
  %55 = vmatpush.bf16.msra.mxu0 0
  %56 = vmatpush.bf16.msra.mxu0 0
  %57 = vmatpush.bf16.msra.mxu0 %v38
  %58 = vmatmul.bf16.gmra.mxu0 %v48
  %v59 = vpop.f32.mrf.mxu0
  %v60 = vadd.f32 %v24, %v59
  %v61 = vpop.f32.mrf.mxu0
  %62 = vdwg.mxu0
  %63 = vmatpush.bf16.msra.mxu0 0
  %64 = vmatpush.bf16.msra.mxu0 0
  %65 = vmatpush.bf16.msra.mxu0 0
  %66 = vmatpush.bf16.msra.mxu0 0
  %67 = vmatpush.bf16.msra.mxu0 0
  %68 = vmatpush.bf16.msra.mxu0 0
  %69 = vmatpush.bf16.msra.mxu0 0
  %70 = vmatpush.bf16.msra.mxu0 %v39
  %71 = vmatmul.bf16.gmra.mxu0 %v48
  %v72 = vpop.f32.mrf.mxu0
  %v73 = vadd.f32 %v24, %v72
  %v74 = vpop.f32.mrf.mxu0
  %75 = vdwg.mxu0
  %76 = vmatpush.bf16.msra.mxu0 0
  %77 = vmatpush.bf16.msra.mxu0 0
  %78 = vmatpush.bf16.msra.mxu0 0
  %79 = vmatpush.bf16.msra.mxu0 0
  %80 = vmatpush.bf16.msra.mxu0 0
  %81 = vmatpush.bf16.msra.mxu0 0
  %82 = vmatpush.bf16.msra.mxu0 0
  %83 = vmatpush.bf16.msra.mxu0 %v40
  %84 = vmatmul.bf16.gmra.mxu0 %v48
  %v85 = vpop.f32.mrf.mxu0
  %v86 = vadd.f32 %v24, %v85
  %v87 = vpop.f32.mrf.mxu0
  %88 = vdwg.mxu0
  %89 = vmatpush.bf16.msra.mxu0 0
  %90 = vmatpush.bf16.msra.mxu0 0
  %91 = vmatpush.bf16.msra.mxu0 0
  %92 = vmatpush.bf16.msra.mxu0 0
  %93 = vmatpush.bf16.msra.mxu0 0
  %94 = vmatpush.bf16.msra.mxu0 0
  %95 = vmatpush.bf16.msra.mxu0 0
  %96 = vmatpush.bf16.msra.mxu0 %v41
  %97 = vmatmul.bf16.gmra.mxu0 %v48
  %v98 = vpop.f32.mrf.mxu0
  %v99 = vadd.f32 %v24, %v98
  %v100 = vpop.f32.mrf.mxu0
  %101 = vdwg.mxu0
  %v106 = vrot.slane %v73, 4
  %v107 = vrot.slane %v99, 4
  %vm108 = vcmask 1043456
  %v109 = vsel %vm108, %v60, %v106
  %v110 = vsel %vm108, %v86, %v107
  %113 = vst [vmem:[%s3] sm:$0xff] %v109
  %114 = vst [vmem:[%s3 + $0x8] sm:$0xff] %v110
  // Predicated region
  $region14: #{hourglass_forward.36} parent=0 // pred_check
    _
  $region15: #{hourglass_forward.36} parent=0 // pred_check_branch
    %116 = sbr.rel (0) target = $region17
  $region16: #{hourglass_forward.36} parent=0 // pred_region
    _
  $region17: #{hourglass_forward.36} parent=0 // pred_fallthru
    _
  // Predicated region
  $region18: #{hourglass_forward.36} parent=0 // pred_check
    _
  $region19: #{hourglass_forward.36} parent=0 // pred_check_branch
    %118 = sbr.rel (0) target = $region21
  $region20: #{hourglass_forward.36} parent=0 // pred_region
    _
  $region21: #{hourglass_forward.36} parent=0 // pred_fallthru
    _

// kernel: hourglass_forward.38
$region0: #{hourglass_forward.38}
  #allocation0 [shape = 'u32[]', space=smem, size = 0x4, offset = 0x4, fixed_abs, tag = 'smem constant byte address 0x4 - core index']
  #allocation1 [shape = 'u32[72,128]{1,0:T(1,128)}', space=vmem, size = 0x9000, scoped, tag = 'internal scratch']
  %s0 = inlined_call_operand.vmem [shape: bf16[4,32], index: 0, kind: input, shape index: {}]
  %s1 = inlined_call_operand.vmem [shape: f32[4,1], index: 1, kind: input, shape index: {}]
  %s2 = inlined_call_operand.vmem [shape: bf16[32,512], index: 2, kind: input, shape index: {}]
  %s3 = inlined_call_operand.vmem [shape: f32[4,512], index: 3, kind: output, shape index: {}]
  %s4 = sld [smem:[#allocation0]]
  $region22: #{hourglass_forward.38} parent=0
    _
  %s6 = ssub.s32 1, %s4
  %s7 = scalar_select 0, %s6, %s4
  // Predicated region
  $region2: #{hourglass_forward.38} parent=0 // pred_check
    _
  $region3: #{hourglass_forward.38} parent=0 // pred_check_branch
    %9 = sbr.rel (0) target = $region5
  $region4: #{hourglass_forward.38} parent=0 // pred_region
    _
  $region5: #{hourglass_forward.38} parent=0 // pred_fallthru
    _
  // Predicated region
  $region6: #{hourglass_forward.38} parent=0 // pred_check
    _
  $region7: #{hourglass_forward.38} parent=0 // pred_check_branch
    %11 = sbr.rel (0) target = $region9
  $region8: #{hourglass_forward.38} parent=0 // pred_region
    _
  $region9: #{hourglass_forward.38} parent=0 // pred_fallthru
    _
  // Predicated region
  $region10: #{hourglass_forward.38} parent=0 // pred_check
    _
  $region11: #{hourglass_forward.38} parent=0 // pred_check_branch
    %13 = sbr.rel (0) target = $region13
  $region12: #{hourglass_forward.38} parent=0 // pred_region
    _
  $region13: #{hourglass_forward.38} parent=0 // pred_fallthru
    _
  %v15 = vld [vmem:[%s0] sm:$0x3]
  %v16 = vld [vmem:[%s2] sm:$0xff]
  %v17 = vld [vmem:[%s2 + $0x8] sm:$0xff]
  %v18 = vld [vmem:[%s2 + $0x10] sm:$0xff]
  %v19 = vld [vmem:[%s2 + $0x18] sm:$0xff]
  %v20 = vld [vmem:[%s2 + $0x20] sm:$0xff]
  %v21 = vld [vmem:[%s2 + $0x28] sm:$0xff]
  %v22 = vld [vmem:[%s2 + $0x30] sm:$0xff]
  %v23 = vld [vmem:[%s2 + $0x38] sm:$0xff]
  %v24 = vld [vmem:[%s1] sm:$0xf]
  %26 = vset.pattern.permute.xlu0 0
  %27 = vperm.xlu0 %26, %v24
  %v28 = vpop.permute.xlu0 %27
  %v38 = vunpack.c.l.b16 %v16
  %v39 = vunpack.c.h.b16 %v16
  %v40 = vunpack.c.l.b16 %v17
  %v41 = vunpack.c.h.b16 %v17
  %v42 = vunpack.c.l.b16 %v18
  %v43 = vunpack.c.h.b16 %v18
  %v44 = vunpack.c.l.b16 %v19
  %v45 = vunpack.c.h.b16 %v19
  %v46 = vunpack.c.l.b16 %v20
  %v47 = vunpack.c.h.b16 %v20
  %v48 = vunpack.c.l.b16 %v21
  %v49 = vunpack.c.h.b16 %v21
  %v50 = vunpack.c.l.b16 %v22
  %v51 = vunpack.c.h.b16 %v22
  %v52 = vunpack.c.l.b16 %v23
  %v53 = vunpack.c.h.b16 %v23
  %v54 = vpack.c.b16 %v42, %v38
  %v55 = vpack.c.b16 %v43, %v39
  %v56 = vpack.c.b16 %v44, %v40
  %v57 = vpack.c.b16 %v45, %v41
  %v58 = vpack.c.b16 %v50, %v46
  %v59 = vpack.c.b16 %v51, %v47
  %v60 = vpack.c.b16 %v52, %v48
  %v61 = vpack.c.b16 %v53, %v49
  %vm70 = vcmask 261120
  %v72 = vsel %vm70, %v15, 0
  %74 = vmatpush.bf16.msra.mxu0 0
  %75 = vmatpush.bf16.msra.mxu0 0
  %76 = vmatpush.bf16.msra.mxu0 0
  %77 = vmatpush.bf16.msra.mxu0 0
  %78 = vmatpush.bf16.msra.mxu0 0
  %79 = vmatpush.bf16.msra.mxu0 0
  %80 = vmatpush.bf16.msra.mxu0 %v58
  %81 = vmatpush.bf16.msra.mxu0 %v54
  %82 = vmatmul.bf16.gmra.mxu0 %v72
  %v83 = vpop.f32.mrf.mxu0
  %v84 = vadd.f32 %v28, %v83
  %v85 = vpop.f32.mrf.mxu0
  %86 = vdwg.mxu0
  %87 = vmatpush.bf16.msra.mxu0 0
  %88 = vmatpush.bf16.msra.mxu0 0
  %89 = vmatpush.bf16.msra.mxu0 0
  %90 = vmatpush.bf16.msra.mxu0 0
  %91 = vmatpush.bf16.msra.mxu0 0
  %92 = vmatpush.bf16.msra.mxu0 0
  %93 = vmatpush.bf16.msra.mxu0 %v59
  %94 = vmatpush.bf16.msra.mxu0 %v55
  %95 = vmatmul.bf16.gmra.mxu0 %v72
  %v96 = vpop.f32.mrf.mxu0
  %v97 = vadd.f32 %v28, %v96
  %v98 = vpop.f32.mrf.mxu0
  %99 = vdwg.mxu0
  %100 = vmatpush.bf16.msra.mxu0 0
  %101 = vmatpush.bf16.msra.mxu0 0
  %102 = vmatpush.bf16.msra.mxu0 0
  %103 = vmatpush.bf16.msra.mxu0 0
  %104 = vmatpush.bf16.msra.mxu0 0
  %105 = vmatpush.bf16.msra.mxu0 0
  %106 = vmatpush.bf16.msra.mxu0 %v60
  %107 = vmatpush.bf16.msra.mxu0 %v56
  %108 = vmatmul.bf16.gmra.mxu0 %v72
  %v109 = vpop.f32.mrf.mxu0
  %v110 = vadd.f32 %v28, %v109
  %v111 = vpop.f32.mrf.mxu0
  %112 = vdwg.mxu0
  %113 = vmatpush.bf16.msra.mxu0 0
  %114 = vmatpush.bf16.msra.mxu0 0
  %115 = vmatpush.bf16.msra.mxu0 0
  %116 = vmatpush.bf16.msra.mxu0 0
  %117 = vmatpush.bf16.msra.mxu0 0
  %118 = vmatpush.bf16.msra.mxu0 0
  %119 = vmatpush.bf16.msra.mxu0 %v61
  %120 = vmatpush.bf16.msra.mxu0 %v57
  %121 = vmatmul.bf16.gmra.mxu0 %v72
  %v122 = vpop.f32.mrf.mxu0
  %v123 = vadd.f32 %v28, %v122
  %v124 = vpop.f32.mrf.mxu0
  %125 = vdwg.mxu0
  %v130 = vrot.slane %v97, 4
  %v131 = vrot.slane %v123, 4
  %vm132 = vcmask 1043456
  %v133 = vsel %vm132, %v84, %v130
  %v134 = vsel %vm132, %v110, %v131
  %137 = vst [vmem:[%s3] sm:$0xff] %v133
  %138 = vst [vmem:[%s3 + $0x8] sm:$0xff] %v134
  // Predicated region
  $region14: #{hourglass_forward.38} parent=0 // pred_check
    _
  $region15: #{hourglass_forward.38} parent=0 // pred_check_branch
    %140 = sbr.rel (0) target = $region17
  $region16: #{hourglass_forward.38} parent=0 // pred_region
    _
  $region17: #{hourglass_forward.38} parent=0 // pred_fallthru
    _
  // Predicated region
  $region18: #{hourglass_forward.38} parent=0 // pred_check
    _
  $region19: #{hourglass_forward.38} parent=0 // pred_check_branch
    %142 = sbr.rel (0) target = $region21
  $region20: #{hourglass_forward.38} parent=0 // pred_region
    _
  $region21: #{hourglass_forward.38} parent=0 // pred_fallthru
    _

</llo_original>
